<compile_context>
chip_gen: v6e
topology: v6e:2x2x1
jax: 0.10.0
libtpu: 0.0.40
codegen_flags: <defaults>
</compile_context>

<pallas_src>
import functools

import jax
import jax.numpy as jnp
from jax.experimental import pallas as pl
from jax.experimental.pallas import tpu as pltpu

NEG_SLOPE = 0.2
BN_EPS = 1e-5
_VMEM_LIMIT = 48 * 1024 * 1024   # headroom on v7x (64 MiB physical per TC)


def _leaky_relu(x):
    return jnp.where(x >= 0, x, NEG_SLOPE * x)


def _round_up(x, m):
    return ((x + m - 1) // m) * m


def _stats_kernel(x_ref, w1_ref, b1_ref, w2_ref,
                  h2_ref, sum_ref, sumsq_ref, *,
                  tile_m, m_total, tiles_per_core, any_padding):
    p = pl.program_id(0)
    i = pl.program_id(1)

    @pl.when(i == 0)
    def _():
        sum_ref[...] = jnp.zeros_like(sum_ref)
        sumsq_ref[...] = jnp.zeros_like(sumsq_ref)

    # conv1 (bias) + LeakyReLU, conv2 -- bf16 MXU operands, f32 accumulation.
    h1 = jnp.dot(x_ref[...], w1_ref[...], preferred_element_type=jnp.float32)
    h1 = _leaky_relu(h1 + b1_ref[...])
    h2 = jnp.dot(h1.astype(jnp.bfloat16), w2_ref[...],
                 preferred_element_type=jnp.float32)        # (tile_m, C2) f32

    # Cache h2 (bf16) to HBM so pass 2 does not re-stream conv1/conv2.
    h2_ref[...] = h2.astype(jnp.bfloat16)

    if not any_padding:
        # M is tile-aligned: no masking work at all (static wrapper check).
        sum_ref[...] += jnp.sum(h2, axis=0, keepdims=True)
        sumsq_ref[...] += jnp.sum(h2 * h2, axis=0, keepdims=True)
    else:
        row0 = (p * tiles_per_core + i) * tile_m
        full_tile = row0 + tile_m <= m_total

        @pl.when(full_tile)
        def _():
            sum_ref[...] += jnp.sum(h2, axis=0, keepdims=True)
            sumsq_ref[...] += jnp.sum(h2 * h2, axis=0, keepdims=True)

        @pl.when(jnp.logical_not(full_tile))
        def _():
            # Padded rows produce nonzero h2 via the conv1 bias -> must mask.
            rows = jax.lax.broadcasted_iota(jnp.int32, (tile_m, 1), 0) + row0
            h2m = jnp.where(rows < m_total, h2, 0.0)
            sum_ref[...] += jnp.sum(h2m, axis=0, keepdims=True)
            sumsq_ref[...] += jnp.sum(h2m * h2m, axis=0, keepdims=True)


def _apply_kernel(h2_ref, scale_ref, shift_ref, w3_ref, o_ref):
    # BN folded to per-channel scale/shift (built in the wrapper) + LeakyReLU.
    h2 = h2_ref[...].astype(jnp.float32)
    h3 = _leaky_relu(h2 * scale_ref[...] + shift_ref[...])
    # conv3 (C2 -> 1) on VPU/XLU: broadcast w3 row, cross-lane reduce.  Avoids
    # a full M-row MXU stream for a single output lane.
    o_ref[...] = jnp.sum(h3 * w3_ref[...], axis=-1, keepdims=True)


def pixel_discriminator(x_nchw, params, tile_m=8192):
    """x_nchw: (N, Cin, H, W) float32.  Returns (N, 1, H, W) float32."""
    w1, b1, w2, gamma, beta, w3 = params
    N, Cin, H, W = x_nchw.shape
    M = N * H * W
    ndf = w1.shape[1]
    c2 = w2.shape[1]

    # Cast to bf16 BEFORE the layout change so the transpose pass moves half
    # the HBM bytes.
    # TODO(synk): keep activations NHWC upstream so this transpose disappears.
    x_rows = jnp.transpose(x_nchw.astype(jnp.bfloat16),
                           (0, 2, 3, 1)).reshape(M, Cin)

    cin_pad = _round_up(max(Cin, 8), 8)
    tile = min(tile_m, _round_up(M, 16))      # mult of 16: bf16 sublane packing
    num_tiles = pl.cdiv(M, tile)
    n_split = 2 if num_tiles >= 2 else 1      # per-TC partial sums on v7x
    tiles_per_core = pl.cdiv(num_tiles, n_split)
    total_tiles = n_split * tiles_per_core
    m_pad = total_tiles * tile
    any_padding = m_pad > M

    x_rows = jnp.pad(x_rows, ((0, m_pad - M), (0, cin_pad - Cin)))

    w1p = jnp.pad(w1, ((0, cin_pad - Cin), (0, 0))).astype(jnp.bfloat16)
    b1f = b1.astype(jnp.float32).reshape(1, ndf)
    w2b = w2.astype(jnp.bfloat16)
    w3row = w3.astype(jnp.float32).reshape(1, c2)

    const2 = lambda p, i: (0, 0)
    row2 = lambda p, i: (p * tiles_per_core + i, 0)

    # ---------- pass 1: stats + bf16 h2 cache ----------
    h2_cache, sums, sumsqs = pl.pallas_call(
        functools.partial(_stats_kernel, tile_m=tile, m_total=M,
                          tiles_per_core=tiles_per_core,
                          any_padding=any_padding),
        out_shape=(jax.ShapeDtypeStruct((m_pad, c2), jnp.bfloat16),
                   jax.ShapeDtypeStruct((n_split, c2), jnp.float32),
                   jax.ShapeDtypeStruct((n_split, c2), jnp.float32)),
        grid=(n_split, tiles_per_core),
        in_specs=[
            pl.BlockSpec((tile, cin_pad), row2),
            pl.BlockSpec((cin_pad, ndf), const2),
            pl.BlockSpec((1, ndf), const2),
            pl.BlockSpec((ndf, c2), const2),
        ],
        out_specs=(
            pl.BlockSpec((tile, c2), row2),
            pl.BlockSpec((1, c2), lambda p, i: (p, 0)),
            pl.BlockSpec((1, c2), lambda p, i: (p, 0)),
        ),
        compiler_params=pltpu.CompilerParams(
            dimension_semantics=("parallel", "arbitrary"),
            vmem_limit_bytes=_VMEM_LIMIT),
    )(x_rows, w1p, b1f, w2b)

    # Reduce per-core partials, then fold BN into a single scale/shift.
    mean = jnp.sum(sums, axis=0, keepdims=True) / M
    ex2 = jnp.sum(sumsqs, axis=0, keepdims=True) / M
    var = ex2 - mean * mean                 # biased variance (PyTorch BN train)
    inv_std = jax.lax.rsqrt(var + BN_EPS)
    scale = gamma.reshape(1, c2) * inv_std
    shift = beta.reshape(1, c2) - mean * scale

    # ---------- pass 2: scale/shift + LeakyReLU + conv3 ----------
    m_out = num_tiles * tile
    out = pl.pallas_call(
        _apply_kernel,
        out_shape=jax.ShapeDtypeStruct((m_out, 1), jnp.float32),
        grid=(num_tiles,),
        in_specs=[
            pl.BlockSpec((tile, c2), lambda i: (i, 0)),
            pl.BlockSpec((1, c2), lambda i: (0, 0)),
            pl.BlockSpec((1, c2), lambda i: (0, 0)),
            pl.BlockSpec((1, c2), lambda i: (0, 0)),
        ],
        out_specs=pl.BlockSpec((tile, 1), lambda i: (i, 0)),
        compiler_params=pltpu.CompilerParams(
            dimension_semantics=("parallel",),   # shards row tiles on v7x TCs
            vmem_limit_bytes=_VMEM_LIMIT),
    )(h2_cache, scale, shift, w3row)

    # (m_out, 1) -> (N, H, W, 1) -> (N, 1, H, W)
    return jnp.transpose(out[:M].reshape(N, H, W, 1), (0, 3, 1, 2))


def init_params(key, input_nc, ndf=64):
    k1, k2, k3, kb = jax.random.split(key, 4)
    # Conv2d 1x1 weights stored as (Cin, Cout) matmul matrices.
    w1 = 0.1 * jax.random.normal(k1, (input_nc, ndf), jnp.float32)
    b1 = 0.1 * jax.random.normal(kb, (1, ndf), jnp.float32)
    w2 = 0.1 * jax.random.normal(k2, (ndf, 2 * ndf), jnp.float32)
    # BatchNorm2d defaults: weight=1, bias=0.
    gamma = jnp.ones((1, 2 * ndf), jnp.float32)
    beta = jnp.zeros((1, 2 * ndf), jnp.float32)
    w3 = 0.1 * jax.random.normal(k3, (2 * ndf, 1), jnp.float32)
    return (w1, b1, w2, gamma, beta, w3)


def reference_forward(x_nchw, params):
    """Pure-JAX reference mirroring the PyTorch module (training-mode BN) with
    the same bf16-operand / f32-accumulation precision choices as the kernel
    (including the bf16 HBM cache of h2 between the two passes)."""
    w1, b1, w2, gamma, beta, w3 = params
    N, Cin, H, W = x_nchw.shape
    x = jnp.transpose(x_nchw.astype(jnp.bfloat16), (0, 2, 3, 1)).reshape(-1, Cin)
    h1 = jnp.dot(x, w1.astype(jnp.bfloat16), preferred_element_type=jnp.float32)
    h1 = _leaky_relu(h1 + b1)
    h2 = jnp.dot(h1.astype(jnp.bfloat16), w2.astype(jnp.bfloat16),
                 preferred_element_type=jnp.float32)
    mean = jnp.mean(h2, axis=0, keepdims=True)
    var = jnp.mean(h2 * h2, axis=0, keepdims=True) - mean * mean
    h2c = h2.astype(jnp.bfloat16).astype(jnp.float32)   # bf16 inter-pass cache
    h2n = (h2c - mean) * jax.lax.rsqrt(var + BN_EPS) * gamma + beta
    h3 = _leaky_relu(h2n)
    out = jnp.dot(h3, w3.astype(jnp.float32), preferred_element_type=jnp.float32)
    return jnp.transpose(out.reshape(N, H, W, 1), (0, 3, 1, 2))


if __name__ == "__main__":
    key = jax.random.PRNGKey(0)
    kx, kp = jax.random.split(key)

    N, Cin, H, W = 2, 4, 16, 16
    ndf = 64
    x = jax.random.normal(kx, (N, Cin, H, W), jnp.float32)
    params = init_params(kp, Cin, ndf)

    y = jax.block_until_ready(pixel_discriminator(x, params))
    y_ref = jax.block_until_ready(reference_forward(x, params))

    assert y.shape == (N, 1, H, W), y.shape
    max_err = float(jnp.max(jnp.abs(y - y_ref)))
    assert jnp.allclose(y, y_ref, atol=1e-2, rtol=1e-2), max_err
    print("KERNEL_OK")
</pallas_src>

<mosaic_0001>
module attributes {stable_mosaic.version = 11 : i64} {
  func.func @_stats_kernel(%arg0: i32, %arg1: i32, %arg2: memref<512x8xbf16, #tpu.memory_space<vmem>>, %arg3: memref<8x64xbf16, #tpu.memory_space<vmem>>, %arg4: memref<1x64xf32, #tpu.memory_space<vmem>>, %arg5: memref<64x128xbf16, #tpu.memory_space<vmem>>, %arg6: memref<512x128xbf16, #tpu.memory_space<vmem>>, %arg7: memref<1x128xf32, #tpu.memory_space<vmem>>, %arg8: memref<1x128xf32, #tpu.memory_space<vmem>>) attributes {dimension_semantics = [#tpu.dimension_semantics<parallel>, #tpu.dimension_semantics<arbitrary>], iteration_bounds = array<i64: 1, 1>, scalar_prefetch = 0 : i64, scratch_operands = 0 : i64, tpu.core_type = #tpu.core_type<tc>, window_params = [{transform_indices = @transform_0, window_bounds = array<i64: 512, 8>}, {pipeline_mode = #tpu.pipeline_mode<synchronous>, transform_indices = @transform_1, window_bounds = array<i64: 8, 64>}, {pipeline_mode = #tpu.pipeline_mode<synchronous>, transform_indices = @transform_2, window_bounds = array<i64: 1, 64>}, {pipeline_mode = #tpu.pipeline_mode<synchronous>, transform_indices = @transform_3, window_bounds = array<i64: 64, 128>}, {transform_indices = @transform_4, window_bounds = array<i64: 512, 128>}, {transform_indices = @transform_5, window_bounds = array<i64: 1, 128>}, {transform_indices = @transform_6, window_bounds = array<i64: 1, 128>}]} {
    %c0_i32 = arith.constant 0 : i32
    %0 = arith.cmpi eq, %arg1, %c0_i32 : i32
    %1 = arith.extui %0 : i1 to i32
    %c0_i32_0 = arith.constant 0 : i32
    %2 = arith.cmpi ne, %1, %c0_i32_0 : i32
    scf.if %2 {
      %cst_23 = arith.constant 0.000000e+00 : f32
      %30 = vector.broadcast %cst_23 : f32 to vector<1x128xf32>
      %c0_24 = arith.constant 0 : index
      %c0_25 = arith.constant 0 : index
      %31 = vector.load %arg7[%c0_24, %c0_25] : memref<1x128xf32, #tpu.memory_space<vmem>>, vector<1x128xf32>
      tpu.vector_store %arg7[%c0_24, %c0_25], %30 {strides = array<i32>} : memref<1x128xf32, #tpu.memory_space<vmem>>, vector<1x128xf32>,
      %cst_26 = arith.constant 0.000000e+00 : f32
      %32 = vector.broadcast %cst_26 : f32 to vector<1x128xf32>
      %c0_27 = arith.constant 0 : index
      %c0_28 = arith.constant 0 : index
      %33 = vector.load %arg8[%c0_27, %c0_28] : memref<1x128xf32, #tpu.memory_space<vmem>>, vector<1x128xf32>
      tpu.vector_store %arg8[%c0_27, %c0_28], %32 {strides = array<i32>} : memref<1x128xf32, #tpu.memory_space<vmem>>, vector<1x128xf32>,
    } else {
    }
    %c0 = arith.constant 0 : index
    %c0_1 = arith.constant 0 : index
    %3 = vector.load %arg2[%c0, %c0_1] : memref<512x8xbf16, #tpu.memory_space<vmem>>, vector<512x8xbf16>
    %c0_2 = arith.constant 0 : index
    %c0_3 = arith.constant 0 : index
    %4 = vector.load %arg3[%c0_2, %c0_3] : memref<8x64xbf16, #tpu.memory_space<vmem>>, vector<8x64xbf16>
    %cst = arith.constant dense<0.000000e+00> : vector<512x64xf32>
    %5 = tpu.matmul %3, %4, %cst {dimension_numbers = #tpu.dot_dimension_numbers<[1], [0], [0], [1], [0, 0, 1, 1], [], []>} : vector<512x8xbf16>, vector<8x64xbf16>, vector<512x64xf32> -> vector<512x64xf32>
    %c0_4 = arith.constant 0 : index
    %c0_5 = arith.constant 0 : index
    %6 = vector.load %arg4[%c0_4, %c0_5] : memref<1x64xf32, #tpu.memory_space<vmem>>, vector<1x64xf32>
    %7 = vector.broadcast %6 : vector<1x64xf32> to vector<512x64xf32>
    %8 = arith.addf %5, %7 : vector<512x64xf32>
    %cst_6 = arith.constant 0.000000e+00 : f32
    %9 = vector.broadcast %cst_6 : f32 to vector<512x64xf32>
    %10 = arith.cmpf oge, %8, %9 : vector<512x64xf32>
    %cst_7 = arith.constant 2.000000e-01 : f32
    %11 = vector.broadcast %cst_7 : f32 to vector<512x64xf32>
    %12 = arith.mulf %11, %8 : vector<512x64xf32>
    %13 = arith.select %10, %8, %12 : vector<512x64xi1>, vector<512x64xf32>
    %14 = arith.truncf %13 : vector<512x64xf32> to vector<512x64xbf16>
    %c0_8 = arith.constant 0 : index
    %c0_9 = arith.constant 0 : index
    %15 = vector.load %arg5[%c0_8, %c0_9] : memref<64x128xbf16, #tpu.memory_space<vmem>>, vector<64x128xbf16>
    %cst_10 = arith.constant dense<0.000000e+00> : vector<512x128xf32>
    %16 = tpu.matmul %14, %15, %cst_10 {dimension_numbers = #tpu.dot_dimension_numbers<[1], [0], [0], [1], [0, 0, 1, 1], [], []>} : vector<512x64xbf16>, vector<64x128xbf16>, vector<512x128xf32> -> vector<512x128xf32>
    %17 = arith.truncf %16 : vector<512x128xf32> to vector<512x128xbf16>
    %c0_11 = arith.constant 0 : index
    %c0_12 = arith.constant 0 : index
    %18 = vector.load %arg6[%c0_11, %c0_12] : memref<512x128xbf16, #tpu.memory_space<vmem>>, vector<512x128xbf16>
    tpu.vector_store %arg6[%c0_11, %c0_12], %17 {strides = array<i32>} : memref<512x128xbf16, #tpu.memory_space<vmem>>, vector<512x128xbf16>,
    %c0_13 = arith.constant 0 : index
    %c0_14 = arith.constant 0 : index
    %19 = vector.load %arg7[%c0_13, %c0_14] : memref<1x128xf32, #tpu.memory_space<vmem>>, vector<1x128xf32>
    %cst_15 = arith.constant dense<0.000000e+00> : vector<128xf32>
    %20 = vector.multi_reduction <add>, %16, %cst_15 [0] : vector<512x128xf32> to vector<128xf32>
    %21 = vector.shape_cast %20 : vector<128xf32> to vector<1x128xf32>
    %22 = arith.addf %19, %21 : vector<1x128xf32>
    %c0_16 = arith.constant 0 : index
    %c0_17 = arith.constant 0 : index
    %23 = vector.load %arg7[%c0_16, %c0_17] : memref<1x128xf32, #tpu.memory_space<vmem>>, vector<1x128xf32>
    tpu.vector_store %arg7[%c0_16, %c0_17], %22 {strides = array<i32>} : memref<1x128xf32, #tpu.memory_space<vmem>>, vector<1x128xf32>,
    %c0_18 = arith.constant 0 : index
    %c0_19 = arith.constant 0 : index
    %24 = vector.load %arg8[%c0_18, %c0_19] : memref<1x128xf32, #tpu.memory_space<vmem>>, vector<1x128xf32>
    %25 = arith.mulf %16, %16 : vector<512x128xf32>
    %cst_20 = arith.constant dense<0.000000e+00> : vector<128xf32>
    %26 = vector.multi_reduction <add>, %25, %cst_20 [0] : vector<512x128xf32> to vector<128xf32>
    %27 = vector.shape_cast %26 : vector<128xf32> to vector<1x128xf32>
    %28 = arith.addf %24, %27 : vector<1x128xf32>
    %c0_21 = arith.constant 0 : index
    %c0_22 = arith.constant 0 : index
    %29 = vector.load %arg8[%c0_21, %c0_22] : memref<1x128xf32, #tpu.memory_space<vmem>>, vector<1x128xf32>
    tpu.vector_store %arg8[%c0_21, %c0_22], %28 {strides = array<i32>} : memref<1x128xf32, #tpu.memory_space<vmem>>, vector<1x128xf32>,
    return
  }
  func.func @transform_0(%arg0: i32, %arg1: i32) -> (i32, i32) {
    %c1_i32 = arith.constant 1 : i32
    %0 = arith.muli %arg0, %c1_i32 : i32
    %1 = arith.addi %0, %arg1 : i32
    %c0_i32 = arith.constant 0 : i32
    %c0_i32_0 = arith.constant 0 : i32
    return %1, %c0_i32 : i32, i32
  }
  func.func @transform_1(%arg0: i32, %arg1: i32) -> (i32, i32) {
    %c0_i32 = arith.constant 0 : i32
    %c0_i32_0 = arith.constant 0 : i32
    %c0_i32_1 = arith.constant 0 : i32
    return %c0_i32, %c0_i32_0 : i32, i32
  }
  func.func @transform_2(%arg0: i32, %arg1: i32) -> (i32, i32) {
    %c0_i32 = arith.constant 0 : i32
    %c0_i32_0 = arith.constant 0 : i32
    %c0_i32_1 = arith.constant 0 : i32
    return %c0_i32, %c0_i32_0 : i32, i32
  }
  func.func @transform_3(%arg0: i32, %arg1: i32) -> (i32, i32) {
    %c0_i32 = arith.constant 0 : i32
    %c0_i32_0 = arith.constant 0 : i32
    %c0_i32_1 = arith.constant 0 : i32
    return %c0_i32, %c0_i32_0 : i32, i32
  }
  func.func @transform_4(%arg0: i32, %arg1: i32) -> (i32, i32) {
    %c1_i32 = arith.constant 1 : i32
    %0 = arith.muli %arg0, %c1_i32 : i32
    %1 = arith.addi %0, %arg1 : i32
    %c0_i32 = arith.constant 0 : i32
    %c0_i32_0 = arith.constant 0 : i32
    return %1, %c0_i32 : i32, i32
  }
  func.func @transform_5(%arg0: i32, %arg1: i32) -> (i32, i32) {
    %c0_i32 = arith.constant 0 : i32
    %c0_i32_0 = arith.constant 0 : i32
    return %arg0, %c0_i32 : i32, i32
  }
  func.func @transform_6(%arg0: i32, %arg1: i32) -> (i32, i32) {
    %c0_i32 = arith.constant 0 : i32
    %c0_i32_0 = arith.constant 0 : i32
    return %arg0, %c0_i32 : i32, i32
  }
}

</mosaic_0001>

<llo_original>
// kernel: tpu_custom_call.1
$region0: #{tpu_custom_call.1}
  #allocation0 [shape = 'u32[]', space=smem, size = 0x4, offset = 0x4, fixed_abs, tag = 'smem constant byte address 0x4 - core index']
  #allocation1 [shape = 'u32[144,128]{1,0:T(1,128)}', space=vmem, size = 0x12000, scoped, tag = 'internal scratch']
  %s0 = inlined_call_operand.vmem [shape: bf16[512,8], index: 0, kind: input, shape index: {}]
  %s1 = inlined_call_operand.vmem [shape: bf16[8,64], index: 1, kind: input, shape index: {}]
  %s2 = inlined_call_operand.vmem [shape: f32[1,64], index: 2, kind: input, shape index: {}]
  %s3 = inlined_call_operand.vmem [shape: bf16[64,128], index: 3, kind: input, shape index: {}]
  %s4 = inlined_call_operand.hbm [shape: bf16[512,128], index: 4, kind: output, shape index: {0}]
  %s5 = inlined_call_operand.hbm [shape: f32[1,128], index: 5, kind: output, shape index: {1}]
  %s6 = inlined_call_operand.hbm [shape: f32[1,128], index: 6, kind: output, shape index: {2}]
  %7 = xla_tuple %s4, %s5, %s6
  %s8 = sld [smem:[#allocation0]]
  $region46: #{tpu_custom_call.1} parent=0
    _
  %s10 = ssub.s32 1, %s8
  %s11 = scalar_select 0, %s10, %s8
  $region1: #{tpu_custom_call.1} parent=0
    #allocation2 [shape = 'u8[131072]{0}', space=vmem, size = 0x20000, scoped, tag = 'output window, operand 0, single buffered']
    #allocation3 [shape = 's32[1]{0}', space=sflag, size = 0x4, scoped, tag = 'scoped memory for tpu_custom_call.1']
    #allocation4 [shape = 'u8[512]{0}', space=vmem, size = 0x400, scoped, tag = 'output window, operand 1, single buffered']
    #allocation5 [shape = 's32[1]{0}', space=sflag, size = 0x4, scoped, tag = 'scoped memory for tpu_custom_call.1']
    #allocation6 [shape = 'u8[512]{0}', space=vmem, size = 0x400, scoped, tag = 'output window, operand 2, single buffered']
    %12 = vsyncpa [#allocation3], 0
    %13 = vsyncpa [#allocation5], 0
    // Predicated region
    $region2: #{tpu_custom_call.1} parent=1 // pred_check
      _
    $region3: #{tpu_custom_call.1} parent=1 // pred_check_branch
      %15 = sbr.rel (0) target = $region5
    $region4: #{tpu_custom_call.1} parent=1 // pred_region
      %s16 = sadd.s32 0, 0
      %s17 = smul.u32 64, %s16
      %p18 = scmp.lt.s32.totalorder %s17, 63
      %s19 = scalar_select %p18, %s17, 63
      %s20 = smul.addr %s19, 4
      %s21 = scalar_lea.vmem %s0, %s20
      %s22 = sadd.s32 0, 0
      %s23 = smul.u32 64, %s22
    $region5: #{tpu_custom_call.1} parent=1 // pred_fallthru
      _
    // Predicated region
    $region6: #{tpu_custom_call.1} parent=1 // pred_check
      _
    $region7: #{tpu_custom_call.1} parent=1 // pred_check_branch
      %25 = sbr.rel (0) target = $region9
    $region8: #{tpu_custom_call.1} parent=1 // pred_region
      _
    $region9: #{tpu_custom_call.1} parent=1 // pred_fallthru
      _
    // Predicated region
    $region10: #{tpu_custom_call.1} parent=1 // pred_check
      _
    $region11: #{tpu_custom_call.1} parent=1 // pred_check_branch
      %27 = sbr.rel (0) target = $region13
    $region12: #{tpu_custom_call.1} parent=1 // pred_region
      _
    $region13: #{tpu_custom_call.1} parent=1 // pred_fallthru
      _
    // Predicated region
    $region14: #{tpu_custom_call.1} parent=1 // pred_check
      _
    $region15: #{tpu_custom_call.1} parent=1 // pred_check_branch
      %29 = sbr.rel (0) target = $region17
    $region16: #{tpu_custom_call.1} parent=1 // pred_region
      _
    $region17: #{tpu_custom_call.1} parent=1 // pred_fallthru
      _
    %s30 = sadd.s32 0, 0
    %s31 = smul.u32 64, %s30
    %p32 = scmp.lt.s32.totalorder %s31, 63
    %s33 = scalar_select %p32, %s31, 63
    %s34 = smul.addr %s33, 4
    %s35 = scalar_lea.vmem %s0, %s34
    %s36 = sadd.s32 0, 0
    %s37 = smul.u32 64, %s36
    %p38 = scmp.lt.s32.totalorder %s37, 63
    %s39 = scalar_select %p38, %s37, 63
    %s40 = smul.addr %s39, 4
    %s41 = scalar_lea.vmem %s0, %s40
    %s42 = sadd.s32 0, 0
    %s43 = smul.u32 64, %s42
    %s44 = sadd.s32 0, 0
    %s45 = smul.u32 64, %s44
    %p47 = scmp.eq.s32.totalorder 0, 0
    // Predicated region
    $region18: #{tpu_custom_call.1} parent=1 // pred_check
      %p48 = pneg %p47
    $region19: #{tpu_custom_call.1} parent=1 // pred_check_branch
      %50 = sbr.rel (%p48) target = $region21
    $region20: #{tpu_custom_call.1} parent=1 // pred_region
      %51 = vst [vmem:[#allocation4] sm:$0x1] 0.0
      %52 = vst [vmem:[#allocation6] sm:$0x1] 0.0
    $region21: #{tpu_custom_call.1} parent=1 // pred_fallthru
      _
    %v53 = vld [vmem:[%s41] sm:$0xf]
    %v54 = vld [vmem:[%s41 + $0x4] sm:$0xf]
    %v55 = vld [vmem:[%s41 + $0x8] sm:$0xf]
    %v56 = vld [vmem:[%s41 + $0xc] sm:$0xf]
    %v57 = vld [vmem:[%s41 + $0x10] sm:$0xf]
    %v58 = vld [vmem:[%s41 + $0x14] sm:$0xf]
    %v59 = vld [vmem:[%s41 + $0x18] sm:$0xf]
    %v60 = vld [vmem:[%s41 + $0x1c] sm:$0xf]
    %v61 = vld [vmem:[%s41 + $0x20] sm:$0xf]
    %v62 = vld [vmem:[%s41 + $0x24] sm:$0xf]
    %v63 = vld [vmem:[%s41 + $0x28] sm:$0xf]
    %v64 = vld [vmem:[%s41 + $0x2c] sm:$0xf]
    %v65 = vld [vmem:[%s41 + $0x30] sm:$0xf]
    %v66 = vld [vmem:[%s41 + $0x34] sm:$0xf]
    %v67 = vld [vmem:[%s41 + $0x38] sm:$0xf]
    %v68 = vld [vmem:[%s41 + $0x3c] sm:$0xf]
    %v69 = vld [vmem:[%s41 + $0x40] sm:$0xf]
    %v70 = vld [vmem:[%s41 + $0x44] sm:$0xf]
    %v71 = vld [vmem:[%s41 + $0x48] sm:$0xf]
    %v72 = vld [vmem:[%s41 + $0x4c] sm:$0xf]
    %v73 = vld [vmem:[%s41 + $0x50] sm:$0xf]
    %v74 = vld [vmem:[%s41 + $0x54] sm:$0xf]
    %v75 = vld [vmem:[%s41 + $0x58] sm:$0xf]
    %v76 = vld [vmem:[%s41 + $0x5c] sm:$0xf]
    %v77 = vld [vmem:[%s41 + $0x60] sm:$0xf]
    %v78 = vld [vmem:[%s41 + $0x64] sm:$0xf]
    %v79 = vld [vmem:[%s41 + $0x68] sm:$0xf]
    %v80 = vld [vmem:[%s41 + $0x6c] sm:$0xf]
    %v81 = vld [vmem:[%s41 + $0x70] sm:$0xf]
    %v82 = vld [vmem:[%s41 + $0x74] sm:$0xf]
    %v83 = vld [vmem:[%s41 + $0x78] sm:$0xf]
    %v84 = vld [vmem:[%s41 + $0x7c] sm:$0xf]
    %v85 = vld [vmem:[%s41 + $0x80] sm:$0xf]
    %v86 = vld [vmem:[%s41 + $0x84] sm:$0xf]
    %v87 = vld [vmem:[%s41 + $0x88] sm:$0xf]
    %v88 = vld [vmem:[%s41 + $0x8c] sm:$0xf]
    %v89 = vld [vmem:[%s41 + $0x90] sm:$0xf]
    %v90 = vld [vmem:[%s41 + $0x94] sm:$0xf]
    %v91 = vld [vmem:[%s41 + $0x98] sm:$0xf]
    %v92 = vld [vmem:[%s41 + $0x9c] sm:$0xf]
    %v93 = vld [vmem:[%s41 + $0xa0] sm:$0xf]
    %v94 = vld [vmem:[%s41 + $0xa4] sm:$0xf]
    %v95 = vld [vmem:[%s41 + $0xa8] sm:$0xf]
    %v96 = vld [vmem:[%s41 + $0xac] sm:$0xf]
    %v97 = vld [vmem:[%s41 + $0xb0] sm:$0xf]
    %v98 = vld [vmem:[%s41 + $0xb4] sm:$0xf]
    %v99 = vld [vmem:[%s41 + $0xb8] sm:$0xf]
    %v100 = vld [vmem:[%s41 + $0xbc] sm:$0xf]
    %v101 = vld [vmem:[%s41 + $0xc0] sm:$0xf]
    %v102 = vld [vmem:[%s41 + $0xc4] sm:$0xf]
    %v103 = vld [vmem:[%s41 + $0xc8] sm:$0xf]
    %v104 = vld [vmem:[%s41 + $0xcc] sm:$0xf]
    %v105 = vld [vmem:[%s41 + $0xd0] sm:$0xf]
    %v106 = vld [vmem:[%s41 + $0xd4] sm:$0xf]
    %v107 = vld [vmem:[%s41 + $0xd8] sm:$0xf]
    %v108 = vld [vmem:[%s41 + $0xdc] sm:$0xf]
    %v109 = vld [vmem:[%s41 + $0xe0] sm:$0xf]
    %v110 = vld [vmem:[%s41 + $0xe4] sm:$0xf]
    %v111 = vld [vmem:[%s41 + $0xe8] sm:$0xf]
    %v112 = vld [vmem:[%s41 + $0xec] sm:$0xf]
    %v113 = vld [vmem:[%s41 + $0xf0] sm:$0xf]
    %v114 = vld [vmem:[%s41 + $0xf4] sm:$0xf]
    %v115 = vld [vmem:[%s41 + $0xf8] sm:$0xf]
    %v116 = vld [vmem:[%s41 + $0xfc] sm:$0xf]
    %v117 = vld [vmem:[%s1] sm:$0xf]
    %v118 = vld [vmem:[%s2] sm:$0x1]
    %v120 = vlaneseq
    %v121 = vshrl.u32 %v120, 7
    %v122 = vsub.s32 0, %v121
    %v123 = vrot.slane %v118, %v122
    %v189 = vunpack.c.l.b16 %v53
    %v190 = vunpack.c.l.b16 %v54
    %v191 = vunpack.c.l.b16 %v55
    %v192 = vunpack.c.l.b16 %v56
    %v193 = vunpack.c.l.b16 %v57
    %v194 = vunpack.c.l.b16 %v58
    %v195 = vunpack.c.l.b16 %v59
    %v196 = vunpack.c.l.b16 %v60
    %v197 = vunpack.c.l.b16 %v61
    %v198 = vunpack.c.l.b16 %v62
    %v199 = vunpack.c.l.b16 %v63
    %v200 = vunpack.c.l.b16 %v64
    %v201 = vunpack.c.l.b16 %v65
    %v202 = vunpack.c.l.b16 %v66
    %v203 = vunpack.c.l.b16 %v67
    %v204 = vunpack.c.l.b16 %v68
    %v205 = vunpack.c.l.b16 %v69
    %v206 = vunpack.c.l.b16 %v70
    %v207 = vunpack.c.l.b16 %v71
    %v208 = vunpack.c.l.b16 %v72
    %v209 = vunpack.c.l.b16 %v73
    %v210 = vunpack.c.l.b16 %v74
    %v211 = vunpack.c.l.b16 %v75
    %v212 = vunpack.c.l.b16 %v76
    %v213 = vunpack.c.l.b16 %v77
    %v214 = vunpack.c.l.b16 %v78
    %v215 = vunpack.c.l.b16 %v79
    %v216 = vunpack.c.l.b16 %v80
    %v217 = vunpack.c.l.b16 %v81
    %v218 = vunpack.c.l.b16 %v82
    %v219 = vunpack.c.l.b16 %v83
    %v220 = vunpack.c.l.b16 %v84
    %v221 = vunpack.c.l.b16 %v85
    %v222 = vunpack.c.l.b16 %v86
    %v223 = vunpack.c.l.b16 %v87
    %v224 = vunpack.c.l.b16 %v88
    %v225 = vunpack.c.l.b16 %v89
    %v226 = vunpack.c.l.b16 %v90
    %v227 = vunpack.c.l.b16 %v91
    %v228 = vunpack.c.l.b16 %v92
    %v229 = vunpack.c.l.b16 %v93
    %v230 = vunpack.c.l.b16 %v94
    %v231 = vunpack.c.l.b16 %v95
    %v232 = vunpack.c.l.b16 %v96
    %v233 = vunpack.c.l.b16 %v97
    %v234 = vunpack.c.l.b16 %v98
    %v235 = vunpack.c.l.b16 %v99
    %v236 = vunpack.c.l.b16 %v100
    %v237 = vunpack.c.l.b16 %v101
    %v238 = vunpack.c.l.b16 %v102
    %v239 = vunpack.c.l.b16 %v103
    %v240 = vunpack.c.l.b16 %v104
    %v241 = vunpack.c.l.b16 %v105
    %v242 = vunpack.c.l.b16 %v106
    %v243 = vunpack.c.l.b16 %v107
    %v244 = vunpack.c.l.b16 %v108
    %v245 = vunpack.c.l.b16 %v109
    %v246 = vunpack.c.l.b16 %v110
    %v247 = vunpack.c.l.b16 %v111
    %v248 = vunpack.c.l.b16 %v112
    %v249 = vunpack.c.l.b16 %v113
    %v250 = vunpack.c.l.b16 %v114
    %v251 = vunpack.c.l.b16 %v115
    %v252 = vunpack.c.l.b16 %v116
    %v253 = vpack.c.b16 %v190, %v189
    %v254 = vpack.c.b16 %v192, %v191
    %v255 = vpack.c.b16 %v194, %v193
    %v256 = vpack.c.b16 %v196, %v195
    %v257 = vpack.c.b16 %v198, %v197
    %v258 = vpack.c.b16 %v200, %v199
    %v259 = vpack.c.b16 %v202, %v201
    %v260 = vpack.c.b16 %v204, %v203
    %v261 = vpack.c.b16 %v206, %v205
    %v262 = vpack.c.b16 %v208, %v207
    %v263 = vpack.c.b16 %v210, %v209
    %v264 = vpack.c.b16 %v212, %v211
    %v265 = vpack.c.b16 %v214, %v213
    %v266 = vpack.c.b16 %v216, %v215
    %v267 = vpack.c.b16 %v218, %v217
    %v268 = vpack.c.b16 %v220, %v219
    %v269 = vpack.c.b16 %v222, %v221
    %v270 = vpack.c.b16 %v224, %v223
    %v271 = vpack.c.b16 %v226, %v225
    %v272 = vpack.c.b16 %v228, %v227
    %v273 = vpack.c.b16 %v230, %v229
    %v274 = vpack.c.b16 %v232, %v231
    %v275 = vpack.c.b16 %v234, %v233
    %v276 = vpack.c.b16 %v236, %v235
    %v277 = vpack.c.b16 %v238, %v237
    %v278 = vpack.c.b16 %v240, %v239
    %v279 = vpack.c.b16 %v242, %v241
    %v280 = vpack.c.b16 %v244, %v243
    %v281 = vpack.c.b16 %v246, %v245
    %v282 = vpack.c.b16 %v248, %v247
    %v283 = vpack.c.b16 %v250, %v249
    %v284 = vpack.c.b16 %v252, %v251
    %vm285 = vcmask 64512
    %v287 = vsel %vm285, %v253, 0
    %v290 = vsel %vm285, %v254, 0
    %v293 = vsel %vm285, %v255, 0
    %v296 = vsel %vm285, %v256, 0
    %v299 = vsel %vm285, %v257, 0
    %v302 = vsel %vm285, %v258, 0
    %v305 = vsel %vm285, %v259, 0
    %v308 = vsel %vm285, %v260, 0
    %v311 = vsel %vm285, %v261, 0
    %v314 = vsel %vm285, %v262, 0
    %v317 = vsel %vm285, %v263, 0
    %v320 = vsel %vm285, %v264, 0
    %v323 = vsel %vm285, %v265, 0
    %v326 = vsel %vm285, %v266, 0
    %v329 = vsel %vm285, %v267, 0
    %v332 = vsel %vm285, %v268, 0
    %v335 = vsel %vm285, %v269, 0
    %v338 = vsel %vm285, %v270, 0
    %v341 = vsel %vm285, %v271, 0
    %v344 = vsel %vm285, %v272, 0
    %v347 = vsel %vm285, %v273, 0
    %v350 = vsel %vm285, %v274, 0
    %v353 = vsel %vm285, %v275, 0
    %v356 = vsel %vm285, %v276, 0
    %v359 = vsel %vm285, %v277, 0
    %v362 = vsel %vm285, %v278, 0
    %v365 = vsel %vm285, %v279, 0
    %v368 = vsel %vm285, %v280, 0
    %v371 = vsel %vm285, %v281, 0
    %v374 = vsel %vm285, %v282, 0
    %v377 = vsel %vm285, %v283, 0
    %v380 = vsel %vm285, %v284, 0
    %vm382 = vcmask 1043456
    %v384 = vsel %vm382, %v117, 0
    %386 = vmatprep.subr.bf16.mxu0 0
    %387 = vmatpush1.bf16.msra.mxu0 0
    %388 = vmatprep.subr.bf16.mxu0 0
    %389 = vmatpush1.bf16.msra.mxu0 0
    %390 = vmatprep.subr.bf16.mxu0 0
    %391 = vmatpush1.bf16.msra.mxu0 0
    %392 = vmatprep.subr.bf16.mxu0 0
    %393 = vmatpush1.bf16.msra.mxu0 0
    %394 = vmatprep.subr.bf16.mxu0 0
    %395 = vmatpush1.bf16.msra.mxu0 0
    %396 = vmatprep.subr.bf16.mxu0 0
    %397 = vmatpush1.bf16.msra.mxu0 0
    %398 = vmatprep.subr.bf16.mxu0 0
    %399 = vmatpush1.bf16.msra.mxu0 0
    %400 = vmatprep.subr.bf16.mxu0 0
    %401 = vmatpush1.bf16.msra.mxu0 %v384
    %402 = vmatprep.subr.bf16.mxu0 0
    %403 = vmatpush2.bf16.msra.mxu0 0
    %404 = vmatprep.subr.bf16.mxu0 0
    %405 = vmatpush2.bf16.msra.mxu0 0
    %406 = vmatprep.subr.bf16.mxu0 0
    %407 = vmatpush2.bf16.msra.mxu0 0
    %408 = vmatprep.subr.bf16.mxu0 0
    %409 = vmatpush2.bf16.msra.mxu0 0
    %410 = vmatprep.subr.bf16.mxu0 0
    %411 = vmatpush2.bf16.msra.mxu0 0
    %412 = vmatprep.subr.bf16.mxu0 0
    %413 = vmatpush2.bf16.msra.mxu0 0
    %414 = vmatprep.subr.bf16.mxu0 0
    %415 = vmatpush2.bf16.msra.mxu0 0
    %416 = vmatprep.subr.bf16.mxu0 0
    %417 = vmatpush2.bf16.msra.mxu0 0
    %418 = vmatprep.mubr.bf16.mxu0 0
    %419 = vmatmul.mubr.bf16.gmra.mxu0 %v287
    %v420 = vpop.f32.mrf.mxu0
    %v421 = vadd.f32 %v123, %v420
    %v422 = vpop.f32.mrf.mxu0
    %v423 = vpop.f32.mrf.mxu0
    %v424 = vadd.f32 %v123, %v423
    %v425 = vpop.f32.mrf.mxu0
    %426 = vmatprep.mubr.bf16.mxu0 0
    %427 = vmatmul.mubr.bf16.gmra.mxu0 %v290
    %v428 = vpop.f32.mrf.mxu0
    %v429 = vadd.f32 %v123, %v428
    %v430 = vpop.f32.mrf.mxu0
    %v431 = vpop.f32.mrf.mxu0
    %v432 = vadd.f32 %v123, %v431
    %v433 = vpop.f32.mrf.mxu0
    %434 = vmatprep.mubr.bf16.mxu0 0
    %435 = vmatmul.mubr.bf16.gmra.mxu0 %v293
    %v436 = vpop.f32.mrf.mxu0
    %v437 = vadd.f32 %v123, %v436
    %v438 = vpop.f32.mrf.mxu0
    %v439 = vpop.f32.mrf.mxu0
    %v440 = vadd.f32 %v123, %v439
    %v441 = vpop.f32.mrf.mxu0
    %442 = vmatprep.mubr.bf16.mxu0 0
    %443 = vmatmul.mubr.bf16.gmra.mxu0 %v296
    %v444 = vpop.f32.mrf.mxu0
    %v445 = vadd.f32 %v123, %v444
    %v446 = vpop.f32.mrf.mxu0
    %v447 = vpop.f32.mrf.mxu0
    %v448 = vadd.f32 %v123, %v447
    %v449 = vpop.f32.mrf.mxu0
    %450 = vmatprep.mubr.bf16.mxu0 0
    %451 = vmatmul.mubr.bf16.gmra.mxu0 %v299
    %v452 = vpop.f32.mrf.mxu0
    %v453 = vadd.f32 %v123, %v452
    %v454 = vpop.f32.mrf.mxu0
    %v455 = vpop.f32.mrf.mxu0
    %v456 = vadd.f32 %v123, %v455
    %v457 = vpop.f32.mrf.mxu0
    %458 = vmatprep.mubr.bf16.mxu0 0
    %459 = vmatmul.mubr.bf16.gmra.mxu0 %v302
    %v460 = vpop.f32.mrf.mxu0
    %v461 = vadd.f32 %v123, %v460
    %v462 = vpop.f32.mrf.mxu0
    %v463 = vpop.f32.mrf.mxu0
    %v464 = vadd.f32 %v123, %v463
    %v465 = vpop.f32.mrf.mxu0
    %466 = vmatprep.mubr.bf16.mxu0 0
    %467 = vmatmul.mubr.bf16.gmra.mxu0 %v305
    %v468 = vpop.f32.mrf.mxu0
    %v469 = vadd.f32 %v123, %v468
    %v470 = vpop.f32.mrf.mxu0
    %v471 = vpop.f32.mrf.mxu0
    %v472 = vadd.f32 %v123, %v471
    %v473 = vpop.f32.mrf.mxu0
    %474 = vmatprep.mubr.bf16.mxu0 0
    %475 = vmatmul.mubr.bf16.gmra.mxu0 %v308
    %v476 = vpop.f32.mrf.mxu0
    %v477 = vadd.f32 %v123, %v476
    %v478 = vpop.f32.mrf.mxu0
    %v479 = vpop.f32.mrf.mxu0
    %v480 = vadd.f32 %v123, %v479
    %v481 = vpop.f32.mrf.mxu0
    %482 = vmatprep.mubr.bf16.mxu0 0
    %483 = vmatmul.mubr.bf16.gmra.mxu0 %v311
    %v484 = vpop.f32.mrf.mxu0
    %v485 = vadd.f32 %v123, %v484
    %v486 = vpop.f32.mrf.mxu0
    %v487 = vpop.f32.mrf.mxu0
    %v488 = vadd.f32 %v123, %v487
    %v489 = vpop.f32.mrf.mxu0
    %490 = vmatprep.mubr.bf16.mxu0 0
    %491 = vmatmul.mubr.bf16.gmra.mxu0 %v314
    %v492 = vpop.f32.mrf.mxu0
    %v493 = vadd.f32 %v123, %v492
    %v494 = vpop.f32.mrf.mxu0
    %v495 = vpop.f32.mrf.mxu0
    %v496 = vadd.f32 %v123, %v495
    %v497 = vpop.f32.mrf.mxu0
    %498 = vmatprep.mubr.bf16.mxu0 0
    %499 = vmatmul.mubr.bf16.gmra.mxu0 %v317
    %v500 = vpop.f32.mrf.mxu0
    %v501 = vadd.f32 %v123, %v500
    %v502 = vpop.f32.mrf.mxu0
    %v503 = vpop.f32.mrf.mxu0
    %v504 = vadd.f32 %v123, %v503
    %v505 = vpop.f32.mrf.mxu0
    %506 = vmatprep.mubr.bf16.mxu0 0
    %507 = vmatmul.mubr.bf16.gmra.mxu0 %v320
    %v508 = vpop.f32.mrf.mxu0
    %v509 = vadd.f32 %v123, %v508
    %v510 = vpop.f32.mrf.mxu0
    %v511 = vpop.f32.mrf.mxu0
    %v512 = vadd.f32 %v123, %v511
    %v513 = vpop.f32.mrf.mxu0
    %514 = vmatprep.mubr.bf16.mxu0 0
    %515 = vmatmul.mubr.bf16.gmra.mxu0 %v323
    %v516 = vpop.f32.mrf.mxu0
    %v517 = vadd.f32 %v123, %v516
    %v518 = vpop.f32.mrf.mxu0
    %v519 = vpop.f32.mrf.mxu0
    %v520 = vadd.f32 %v123, %v519
    %v521 = vpop.f32.mrf.mxu0
    %522 = vmatprep.mubr.bf16.mxu0 0
    %523 = vmatmul.mubr.bf16.gmra.mxu0 %v326
    %v524 = vpop.f32.mrf.mxu0
    %v525 = vadd.f32 %v123, %v524
    %v526 = vpop.f32.mrf.mxu0
    %v527 = vpop.f32.mrf.mxu0
    %v528 = vadd.f32 %v123, %v527
    %v529 = vpop.f32.mrf.mxu0
    %530 = vmatprep.mubr.bf16.mxu0 0
    %531 = vmatmul.mubr.bf16.gmra.mxu0 %v329
    %v532 = vpop.f32.mrf.mxu0
    %v533 = vadd.f32 %v123, %v532
    %v534 = vpop.f32.mrf.mxu0
    %v535 = vpop.f32.mrf.mxu0
    %v536 = vadd.f32 %v123, %v535
    %v537 = vpop.f32.mrf.mxu0
    %538 = vmatprep.mubr.bf16.mxu0 0
    %539 = vmatmul.mubr.bf16.gmra.mxu0 %v332
    %v540 = vpop.f32.mrf.mxu0
    %v541 = vadd.f32 %v123, %v540
    %v542 = vpop.f32.mrf.mxu0
    %v543 = vpop.f32.mrf.mxu0
    %v544 = vadd.f32 %v123, %v543
    %v545 = vpop.f32.mrf.mxu0
    %546 = vmatprep.mubr.bf16.mxu0 0
    %547 = vmatmul.mubr.bf16.gmra.mxu0 %v335
    %v548 = vpop.f32.mrf.mxu0
    %v549 = vadd.f32 %v123, %v548
    %v550 = vpop.f32.mrf.mxu0
    %v551 = vpop.f32.mrf.mxu0
    %v552 = vadd.f32 %v123, %v551
    %v553 = vpop.f32.mrf.mxu0
    %554 = vmatprep.mubr.bf16.mxu0 0
    %555 = vmatmul.mubr.bf16.gmra.mxu0 %v338
    %v556 = vpop.f32.mrf.mxu0
    %v557 = vadd.f32 %v123, %v556
    %v558 = vpop.f32.mrf.mxu0
    %v559 = vpop.f32.mrf.mxu0
    %v560 = vadd.f32 %v123, %v559
    %v561 = vpop.f32.mrf.mxu0
    %562 = vmatprep.mubr.bf16.mxu0 0
    %563 = vmatmul.mubr.bf16.gmra.mxu0 %v341
    %v564 = vpop.f32.mrf.mxu0
    %v565 = vadd.f32 %v123, %v564
    %v566 = vpop.f32.mrf.mxu0
    %v567 = vpop.f32.mrf.mxu0
    %v568 = vadd.f32 %v123, %v567
    %v569 = vpop.f32.mrf.mxu0
    %570 = vmatprep.mubr.bf16.mxu0 0
    %571 = vmatmul.mubr.bf16.gmra.mxu0 %v344
    %v572 = vpop.f32.mrf.mxu0
    %v573 = vadd.f32 %v123, %v572
    %v574 = vpop.f32.mrf.mxu0
    %v575 = vpop.f32.mrf.mxu0
    %v576 = vadd.f32 %v123, %v575
    %v577 = vpop.f32.mrf.mxu0
    %578 = vmatprep.mubr.bf16.mxu0 0
    %579 = vmatmul.mubr.bf16.gmra.mxu0 %v347
    %v580 = vpop.f32.mrf.mxu0
    %v581 = vadd.f32 %v123, %v580
    %v582 = vpop.f32.mrf.mxu0
    %v583 = vpop.f32.mrf.mxu0
    %v584 = vadd.f32 %v123, %v583
    %v585 = vpop.f32.mrf.mxu0
    %586 = vmatprep.mubr.bf16.mxu0 0
    %587 = vmatmul.mubr.bf16.gmra.mxu0 %v350
    %v588 = vpop.f32.mrf.mxu0
    %v589 = vadd.f32 %v123, %v588
    %v590 = vpop.f32.mrf.mxu0
    %v591 = vpop.f32.mrf.mxu0
    %v592 = vadd.f32 %v123, %v591
    %v593 = vpop.f32.mrf.mxu0
    %594 = vmatprep.mubr.bf16.mxu0 0
    %595 = vmatmul.mubr.bf16.gmra.mxu0 %v353
    %v596 = vpop.f32.mrf.mxu0
    %v597 = vadd.f32 %v123, %v596
    %v598 = vpop.f32.mrf.mxu0
    %v599 = vpop.f32.mrf.mxu0
    %v600 = vadd.f32 %v123, %v599
    %v601 = vpop.f32.mrf.mxu0
    %602 = vmatprep.mubr.bf16.mxu0 0
    %603 = vmatmul.mubr.bf16.gmra.mxu0 %v356
    %v604 = vpop.f32.mrf.mxu0
    %v605 = vadd.f32 %v123, %v604
    %v606 = vpop.f32.mrf.mxu0
    %v607 = vpop.f32.mrf.mxu0
    %v608 = vadd.f32 %v123, %v607
    %v609 = vpop.f32.mrf.mxu0
    %610 = vmatprep.mubr.bf16.mxu0 0
    %611 = vmatmul.mubr.bf16.gmra.mxu0 %v359
    %v612 = vpop.f32.mrf.mxu0
    %v613 = vadd.f32 %v123, %v612
    %v614 = vpop.f32.mrf.mxu0
    %v615 = vpop.f32.mrf.mxu0
    %v616 = vadd.f32 %v123, %v615
    %v617 = vpop.f32.mrf.mxu0
    %618 = vmatprep.mubr.bf16.mxu0 0
    %619 = vmatmul.mubr.bf16.gmra.mxu0 %v362
    %v620 = vpop.f32.mrf.mxu0
    %v621 = vadd.f32 %v123, %v620
    %v622 = vpop.f32.mrf.mxu0
    %v623 = vpop.f32.mrf.mxu0
    %v624 = vadd.f32 %v123, %v623
    %v625 = vpop.f32.mrf.mxu0
    %626 = vmatprep.mubr.bf16.mxu0 0
    %627 = vmatmul.mubr.bf16.gmra.mxu0 %v365
    %v628 = vpop.f32.mrf.mxu0
    %v629 = vadd.f32 %v123, %v628
    %v630 = vpop.f32.mrf.mxu0
    %v631 = vpop.f32.mrf.mxu0
    %v632 = vadd.f32 %v123, %v631
    %v633 = vpop.f32.mrf.mxu0
    %634 = vmatprep.mubr.bf16.mxu0 0
    %635 = vmatmul.mubr.bf16.gmra.mxu0 %v368
    %v636 = vpop.f32.mrf.mxu0
    %v637 = vadd.f32 %v123, %v636
    %v638 = vpop.f32.mrf.mxu0
    %v639 = vpop.f32.mrf.mxu0
    %v640 = vadd.f32 %v123, %v639
    %v641 = vpop.f32.mrf.mxu0
    %642 = vmatprep.mubr.bf16.mxu0 0
    %643 = vmatmul.mubr.bf16.gmra.mxu0 %v371
    %v644 = vpop.f32.mrf.mxu0
    %v645 = vadd.f32 %v123, %v644
    %v646 = vpop.f32.mrf.mxu0
    %v647 = vpop.f32.mrf.mxu0
    %v648 = vadd.f32 %v123, %v647
    %v649 = vpop.f32.mrf.mxu0
    %650 = vmatprep.mubr.bf16.mxu0 0
    %651 = vmatmul.mubr.bf16.gmra.mxu0 %v374
    %v652 = vpop.f32.mrf.mxu0
    %v653 = vadd.f32 %v123, %v652
    %v654 = vpop.f32.mrf.mxu0
    %v655 = vpop.f32.mrf.mxu0
    %v656 = vadd.f32 %v123, %v655
    %v657 = vpop.f32.mrf.mxu0
    %658 = vmatprep.mubr.bf16.mxu0 0
    %659 = vmatmul.mubr.bf16.gmra.mxu0 %v377
    %v660 = vpop.f32.mrf.mxu0
    %v661 = vadd.f32 %v123, %v660
    %v662 = vpop.f32.mrf.mxu0
    %v663 = vpop.f32.mrf.mxu0
    %v664 = vadd.f32 %v123, %v663
    %v665 = vpop.f32.mrf.mxu0
    %666 = vmatprep.mubr.bf16.mxu0 0
    %667 = vmatmul.mubr.bf16.gmra.mxu0 %v380
    %v668 = vpop.f32.mrf.mxu0
    %v669 = vadd.f32 %v123, %v668
    %v670 = vpop.f32.mrf.mxu0
    %v671 = vpop.f32.mrf.mxu0
    %v672 = vadd.f32 %v123, %v671
    %v673 = vpop.f32.mrf.mxu0
    %674 = vdwg.mxu0
    %vm675 = vcmp.ge.f32.partialorder %v421, 0.0
    %vm676 = vcmp.ge.f32.partialorder %v424, 0.0
    %vm677 = vcmp.ge.f32.partialorder %v429, 0.0
    %vm678 = vcmp.ge.f32.partialorder %v432, 0.0
    %vm679 = vcmp.ge.f32.partialorder %v437, 0.0
    %vm680 = vcmp.ge.f32.partialorder %v440, 0.0
    %vm681 = vcmp.ge.f32.partialorder %v445, 0.0
    %vm682 = vcmp.ge.f32.partialorder %v448, 0.0
    %vm683 = vcmp.ge.f32.partialorder %v453, 0.0
    %vm684 = vcmp.ge.f32.partialorder %v456, 0.0
    %vm685 = vcmp.ge.f32.partialorder %v461, 0.0
    %vm686 = vcmp.ge.f32.partialorder %v464, 0.0
    %vm687 = vcmp.ge.f32.partialorder %v469, 0.0
    %vm688 = vcmp.ge.f32.partialorder %v472, 0.0
    %vm689 = vcmp.ge.f32.partialorder %v477, 0.0
    %vm690 = vcmp.ge.f32.partialorder %v480, 0.0
    %vm691 = vcmp.ge.f32.partialorder %v485, 0.0
    %vm692 = vcmp.ge.f32.partialorder %v488, 0.0
    %vm693 = vcmp.ge.f32.partialorder %v493, 0.0
    %vm694 = vcmp.ge.f32.partialorder %v496, 0.0
    %vm695 = vcmp.ge.f32.partialorder %v501, 0.0
    %vm696 = vcmp.ge.f32.partialorder %v504, 0.0
    %vm697 = vcmp.ge.f32.partialorder %v509, 0.0
    %vm698 = vcmp.ge.f32.partialorder %v512, 0.0
    %vm699 = vcmp.ge.f32.partialorder %v517, 0.0
    %vm700 = vcmp.ge.f32.partialorder %v520, 0.0
    %vm701 = vcmp.ge.f32.partialorder %v525, 0.0
    %vm702 = vcmp.ge.f32.partialorder %v528, 0.0
    %vm703 = vcmp.ge.f32.partialorder %v533, 0.0
    %vm704 = vcmp.ge.f32.partialorder %v536, 0.0
    %vm705 = vcmp.ge.f32.partialorder %v541, 0.0
    %vm706 = vcmp.ge.f32.partialorder %v544, 0.0
    %vm707 = vcmp.ge.f32.partialorder %v549, 0.0
    %vm708 = vcmp.ge.f32.partialorder %v552, 0.0
    %vm709 = vcmp.ge.f32.partialorder %v557, 0.0
    %vm710 = vcmp.ge.f32.partialorder %v560, 0.0
    %vm711 = vcmp.ge.f32.partialorder %v565, 0.0
    %vm712 = vcmp.ge.f32.partialorder %v568, 0.0
    %vm713 = vcmp.ge.f32.partialorder %v573, 0.0
    %vm714 = vcmp.ge.f32.partialorder %v576, 0.0
    %vm715 = vcmp.ge.f32.partialorder %v581, 0.0
    %vm716 = vcmp.ge.f32.partialorder %v584, 0.0
    %vm717 = vcmp.ge.f32.partialorder %v589, 0.0
    %vm718 = vcmp.ge.f32.partialorder %v592, 0.0
    %vm719 = vcmp.ge.f32.partialorder %v597, 0.0
    %vm720 = vcmp.ge.f32.partialorder %v600, 0.0
    %vm721 = vcmp.ge.f32.partialorder %v605, 0.0
    %vm722 = vcmp.ge.f32.partialorder %v608, 0.0
    %vm723 = vcmp.ge.f32.partialorder %v613, 0.0
    %vm724 = vcmp.ge.f32.partialorder %v616, 0.0
    %vm725 = vcmp.ge.f32.partialorder %v621, 0.0
    %vm726 = vcmp.ge.f32.partialorder %v624, 0.0
    %vm727 = vcmp.ge.f32.partialorder %v629, 0.0
    %vm728 = vcmp.ge.f32.partialorder %v632, 0.0
    %vm729 = vcmp.ge.f32.partialorder %v637, 0.0
    %vm730 = vcmp.ge.f32.partialorder %v640, 0.0
    %vm731 = vcmp.ge.f32.partialorder %v645, 0.0
    %vm732 = vcmp.ge.f32.partialorder %v648, 0.0
    %vm733 = vcmp.ge.f32.partialorder %v653, 0.0
    %vm734 = vcmp.ge.f32.partialorder %v656, 0.0
    %vm735 = vcmp.ge.f32.partialorder %v661, 0.0
    %vm736 = vcmp.ge.f32.partialorder %v664, 0.0
    %vm737 = vcmp.ge.f32.partialorder %v669, 0.0
    %vm738 = vcmp.ge.f32.partialorder %v672, 0.0
    %v739 = vmul.f32 %v421, 0.2
    %v740 = vmul.f32 %v424, 0.2
    %v741 = vmul.f32 %v429, 0.2
    %v742 = vmul.f32 %v432, 0.2
    %v743 = vmul.f32 %v437, 0.2
    %v744 = vmul.f32 %v440, 0.2
    %v745 = vmul.f32 %v445, 0.2
    %v746 = vmul.f32 %v448, 0.2
    %v747 = vmul.f32 %v453, 0.2
    %v748 = vmul.f32 %v456, 0.2
    %v749 = vmul.f32 %v461, 0.2
    %v750 = vmul.f32 %v464, 0.2
    %v751 = vmul.f32 %v469, 0.2
    %v752 = vmul.f32 %v472, 0.2
    %v753 = vmul.f32 %v477, 0.2
    %v754 = vmul.f32 %v480, 0.2
    %v755 = vmul.f32 %v485, 0.2
    %v756 = vmul.f32 %v488, 0.2
    %v757 = vmul.f32 %v493, 0.2
    %v758 = vmul.f32 %v496, 0.2
    %v759 = vmul.f32 %v501, 0.2
    %v760 = vmul.f32 %v504, 0.2
    %v761 = vmul.f32 %v509, 0.2
    %v762 = vmul.f32 %v512, 0.2
    %v763 = vmul.f32 %v517, 0.2
    %v764 = vmul.f32 %v520, 0.2
    %v765 = vmul.f32 %v525, 0.2
    %v766 = vmul.f32 %v528, 0.2
    %v767 = vmul.f32 %v533, 0.2
    %v768 = vmul.f32 %v536, 0.2
    %v769 = vmul.f32 %v541, 0.2
    %v770 = vmul.f32 %v544, 0.2
    %v771 = vmul.f32 %v549, 0.2
    %v772 = vmul.f32 %v552, 0.2
    %v773 = vmul.f32 %v557, 0.2
    %v774 = vmul.f32 %v560, 0.2
    %v775 = vmul.f32 %v565, 0.2
    %v776 = vmul.f32 %v568, 0.2
    %v777 = vmul.f32 %v573, 0.2
    %v778 = vmul.f32 %v576, 0.2
    %v779 = vmul.f32 %v581, 0.2
    %v780 = vmul.f32 %v584, 0.2
    %v781 = vmul.f32 %v589, 0.2
    %v782 = vmul.f32 %v592, 0.2
    %v783 = vmul.f32 %v597, 0.2
    %v784 = vmul.f32 %v600, 0.2
    %v785 = vmul.f32 %v605, 0.2
    %v786 = vmul.f32 %v608, 0.2
    %v787 = vmul.f32 %v613, 0.2
    %v788 = vmul.f32 %v616, 0.2
    %v789 = vmul.f32 %v621, 0.2
    %v790 = vmul.f32 %v624, 0.2
    %v791 = vmul.f32 %v629, 0.2
    %v792 = vmul.f32 %v632, 0.2
    %v793 = vmul.f32 %v637, 0.2
    %v794 = vmul.f32 %v640, 0.2
    %v795 = vmul.f32 %v645, 0.2
    %v796 = vmul.f32 %v648, 0.2
    %v797 = vmul.f32 %v653, 0.2
    %v798 = vmul.f32 %v656, 0.2
    %v799 = vmul.f32 %v661, 0.2
    %v800 = vmul.f32 %v664, 0.2
    %v801 = vmul.f32 %v669, 0.2
    %v802 = vmul.f32 %v672, 0.2
    %v803 = vsel %vm675, %v421, %v739
    %v804 = vsel %vm676, %v424, %v740
    %v805 = vsel %vm677, %v429, %v741
    %v806 = vsel %vm678, %v432, %v742
    %v807 = vsel %vm679, %v437, %v743
    %v808 = vsel %vm680, %v440, %v744
    %v809 = vsel %vm681, %v445, %v745
    %v810 = vsel %vm682, %v448, %v746
    %v811 = vsel %vm683, %v453, %v747
    %v812 = vsel %vm684, %v456, %v748
    %v813 = vsel %vm685, %v461, %v749
    %v814 = vsel %vm686, %v464, %v750
    %v815 = vsel %vm687, %v469, %v751
    %v816 = vsel %vm688, %v472, %v752
    %v817 = vsel %vm689, %v477, %v753
    %v818 = vsel %vm690, %v480, %v754
    %v819 = vsel %vm691, %v485, %v755
    %v820 = vsel %vm692, %v488, %v756
    %v821 = vsel %vm693, %v493, %v757
    %v822 = vsel %vm694, %v496, %v758
    %v823 = vsel %vm695, %v501, %v759
    %v824 = vsel %vm696, %v504, %v760
    %v825 = vsel %vm697, %v509, %v761
    %v826 = vsel %vm698, %v512, %v762
    %v827 = vsel %vm699, %v517, %v763
    %v828 = vsel %vm700, %v520, %v764
    %v829 = vsel %vm701, %v525, %v765
    %v830 = vsel %vm702, %v528, %v766
    %v831 = vsel %vm703, %v533, %v767
    %v832 = vsel %vm704, %v536, %v768
    %v833 = vsel %vm705, %v541, %v769
    %v834 = vsel %vm706, %v544, %v770
    %v835 = vsel %vm707, %v549, %v771
    %v836 = vsel %vm708, %v552, %v772
    %v837 = vsel %vm709, %v557, %v773
    %v838 = vsel %vm710, %v560, %v774
    %v839 = vsel %vm711, %v565, %v775
    %v840 = vsel %vm712, %v568, %v776
    %v841 = vsel %vm713, %v573, %v777
    %v842 = vsel %vm714, %v576, %v778
    %v843 = vsel %vm715, %v581, %v779
    %v844 = vsel %vm716, %v584, %v780
    %v845 = vsel %vm717, %v589, %v781
    %v846 = vsel %vm718, %v592, %v782
    %v847 = vsel %vm719, %v597, %v783
    %v848 = vsel %vm720, %v600, %v784
    %v849 = vsel %vm721, %v605, %v785
    %v850 = vsel %vm722, %v608, %v786
    %v851 = vsel %vm723, %v613, %v787
    %v852 = vsel %vm724, %v616, %v788
    %v853 = vsel %vm725, %v621, %v789
    %v854 = vsel %vm726, %v624, %v790
    %v855 = vsel %vm727, %v629, %v791
    %v856 = vsel %vm728, %v632, %v792
    %v857 = vsel %vm729, %v637, %v793
    %v858 = vsel %vm730, %v640, %v794
    %v859 = vsel %vm731, %v645, %v795
    %v860 = vsel %vm732, %v648, %v796
    %v861 = vsel %vm733, %v653, %v797
    %v862 = vsel %vm734, %v656, %v798
    %v863 = vsel %vm735, %v661, %v799
    %v864 = vsel %vm736, %v664, %v800
    %v865 = vsel %vm737, %v669, %v801
    %v866 = vsel %vm738, %v672, %v802
    %v867 = vpack.c.bf16 %v804, %v803
    %v868 = vpack.c.bf16 %v806, %v805
    %v869 = vpack.c.bf16 %v808, %v807
    %v870 = vpack.c.bf16 %v810, %v809
    %v871 = vpack.c.bf16 %v812, %v811
    %v872 = vpack.c.bf16 %v814, %v813
    %v873 = vpack.c.bf16 %v816, %v815
    %v874 = vpack.c.bf16 %v818, %v817
    %v875 = vpack.c.bf16 %v820, %v819
    %v876 = vpack.c.bf16 %v822, %v821
    %v877 = vpack.c.bf16 %v824, %v823
    %v878 = vpack.c.bf16 %v826, %v825
    %v879 = vpack.c.bf16 %v828, %v827
    %v880 = vpack.c.bf16 %v830, %v829
    %v881 = vpack.c.bf16 %v832, %v831
    %v882 = vpack.c.bf16 %v834, %v833
    %v883 = vpack.c.bf16 %v836, %v835
    %v884 = vpack.c.bf16 %v838, %v837
    %v885 = vpack.c.bf16 %v840, %v839
    %v886 = vpack.c.bf16 %v842, %v841
    %v887 = vpack.c.bf16 %v844, %v843
    %v888 = vpack.c.bf16 %v846, %v845
    %v889 = vpack.c.bf16 %v848, %v847
    %v890 = vpack.c.bf16 %v850, %v849
    %v891 = vpack.c.bf16 %v852, %v851
    %v892 = vpack.c.bf16 %v854, %v853
    %v893 = vpack.c.bf16 %v856, %v855
    %v894 = vpack.c.bf16 %v858, %v857
    %v895 = vpack.c.bf16 %v860, %v859
    %v896 = vpack.c.bf16 %v862, %v861
    %v897 = vpack.c.bf16 %v864, %v863
    %v898 = vpack.c.bf16 %v866, %v865
    %v899 = vld [vmem:[%s3] sm:$0xf]
    %v900 = vld [vmem:[%s3 + $0x4] sm:$0xf]
    %v901 = vld [vmem:[%s3 + $0x8] sm:$0xf]
    %v902 = vld [vmem:[%s3 + $0xc] sm:$0xf]
    %v903 = vld [vmem:[%s3 + $0x10] sm:$0xf]
    %v904 = vld [vmem:[%s3 + $0x14] sm:$0xf]
    %v905 = vld [vmem:[%s3 + $0x18] sm:$0xf]
    %v906 = vld [vmem:[%s3 + $0x1c] sm:$0xf]
    %v915 = vunpack.c.l.b16 %v899
    %v916 = vunpack.c.l.b16 %v900
    %v917 = vunpack.c.l.b16 %v901
    %v918 = vunpack.c.l.b16 %v902
    %v919 = vunpack.c.l.b16 %v903
    %v920 = vunpack.c.l.b16 %v904
    %v921 = vunpack.c.l.b16 %v905
    %v922 = vunpack.c.l.b16 %v906
    %v923 = vpack.c.b16 %v916, %v915
    %v924 = vpack.c.b16 %v918, %v917
    %v925 = vpack.c.b16 %v920, %v919
    %v926 = vpack.c.b16 %v922, %v921
    %vm931 = vcmask 523264
    %v933 = vsel %vm931, %v867, 0
    %v936 = vsel %vm931, %v868, 0
    %v939 = vsel %vm931, %v869, 0
    %v942 = vsel %vm931, %v870, 0
    %v945 = vsel %vm931, %v871, 0
    %v948 = vsel %vm931, %v872, 0
    %v951 = vsel %vm931, %v873, 0
    %v954 = vsel %vm931, %v874, 0
    %v957 = vsel %vm931, %v875, 0
    %v960 = vsel %vm931, %v876, 0
    %v963 = vsel %vm931, %v877, 0
    %v966 = vsel %vm931, %v878, 0
    %v969 = vsel %vm931, %v879, 0
    %v972 = vsel %vm931, %v880, 0
    %v975 = vsel %vm931, %v881, 0
    %v978 = vsel %vm931, %v882, 0
    %v981 = vsel %vm931, %v883, 0
    %v984 = vsel %vm931, %v884, 0
    %v987 = vsel %vm931, %v885, 0
    %v990 = vsel %vm931, %v886, 0
    %v993 = vsel %vm931, %v887, 0
    %v996 = vsel %vm931, %v888, 0
    %v999 = vsel %vm931, %v889, 0
    %v1002 = vsel %vm931, %v890, 0
    %v1005 = vsel %vm931, %v891, 0
    %v1008 = vsel %vm931, %v892, 0
    %v1011 = vsel %vm931, %v893, 0
    %v1014 = vsel %vm931, %v894, 0
    %v1017 = vsel %vm931, %v895, 0
    %v1020 = vsel %vm931, %v896, 0
    %v1023 = vsel %vm931, %v897, 0
    %v1026 = vsel %vm931, %v898, 0
    %1028 = vmatprep.subr.bf16.mxu0 0
    %1029 = vmatpush1.bf16.msra.mxu0 0
    %1030 = vmatprep.subr.bf16.mxu0 0
    %1031 = vmatpush1.bf16.msra.mxu0 0
    %1032 = vmatprep.subr.bf16.mxu0 0
    %1033 = vmatpush1.bf16.msra.mxu0 0
    %1034 = vmatprep.subr.bf16.mxu0 0
    %1035 = vmatpush1.bf16.msra.mxu0 0
    %1036 = vmatprep.subr.bf16.mxu0 0
    %1037 = vmatpush1.bf16.msra.mxu0 %v926
    %1038 = vmatprep.subr.bf16.mxu0 0
    %1039 = vmatpush1.bf16.msra.mxu0 %v925
    %1040 = vmatprep.subr.bf16.mxu0 0
    %1041 = vmatpush1.bf16.msra.mxu0 %v924
    %1042 = vmatprep.subr.bf16.mxu0 0
    %1043 = vmatpush1.bf16.msra.mxu0 %v923
    %1044 = vmatprep.subr.bf16.mxu0 0
    %1045 = vmatpush2.bf16.msra.mxu0 0
    %1046 = vmatprep.subr.bf16.mxu0 0
    %1047 = vmatpush2.bf16.msra.mxu0 0
    %1048 = vmatprep.subr.bf16.mxu0 0
    %1049 = vmatpush2.bf16.msra.mxu0 0
    %1050 = vmatprep.subr.bf16.mxu0 0
    %1051 = vmatpush2.bf16.msra.mxu0 0
    %1052 = vmatprep.subr.bf16.mxu0 0
    %1053 = vmatpush2.bf16.msra.mxu0 0
    %1054 = vmatprep.subr.bf16.mxu0 0
    %1055 = vmatpush2.bf16.msra.mxu0 0
    %1056 = vmatprep.subr.bf16.mxu0 0
    %1057 = vmatpush2.bf16.msra.mxu0 0
    %1058 = vmatprep.subr.bf16.mxu0 0
    %1059 = vmatpush2.bf16.msra.mxu0 0
    %1060 = vmatprep.mubr.bf16.mxu0 0
    %1061 = vmatmul.mubr.bf16.gmra.mxu0 %v933
    %v1062 = vpop.f32.mrf.mxu0
    %v1063 = vadd.f32 0.0, %v1062
    %v1064 = vpop.f32.mrf.mxu0
    %v1065 = vpop.f32.mrf.mxu0
    %v1066 = vadd.f32 0.0, %v1065
    %v1067 = vpop.f32.mrf.mxu0
    %1068 = vmatprep.mubr.bf16.mxu0 0
    %1069 = vmatmul.mubr.bf16.gmra.mxu0 %v936
    %v1070 = vpop.f32.mrf.mxu0
    %v1071 = vadd.f32 0.0, %v1070
    %v1072 = vpop.f32.mrf.mxu0
    %v1073 = vpop.f32.mrf.mxu0
    %v1074 = vadd.f32 0.0, %v1073
    %v1075 = vpop.f32.mrf.mxu0
    %1076 = vmatprep.mubr.bf16.mxu0 0
    %1077 = vmatmul.mubr.bf16.gmra.mxu0 %v939
    %v1078 = vpop.f32.mrf.mxu0
    %v1079 = vadd.f32 0.0, %v1078
    %v1080 = vpop.f32.mrf.mxu0
    %v1081 = vpop.f32.mrf.mxu0
    %v1082 = vadd.f32 0.0, %v1081
    %v1083 = vpop.f32.mrf.mxu0
    %1084 = vmatprep.mubr.bf16.mxu0 0
    %1085 = vmatmul.mubr.bf16.gmra.mxu0 %v942
    %v1086 = vpop.f32.mrf.mxu0
    %v1087 = vadd.f32 0.0, %v1086
    %v1088 = vpop.f32.mrf.mxu0
    %v1089 = vpop.f32.mrf.mxu0
    %v1090 = vadd.f32 0.0, %v1089
    %v1091 = vpop.f32.mrf.mxu0
    %1092 = vmatprep.mubr.bf16.mxu0 0
    %1093 = vmatmul.mubr.bf16.gmra.mxu0 %v945
    %v1094 = vpop.f32.mrf.mxu0
    %v1095 = vadd.f32 0.0, %v1094
    %v1096 = vpop.f32.mrf.mxu0
    %v1097 = vpop.f32.mrf.mxu0
    %v1098 = vadd.f32 0.0, %v1097
    %v1099 = vpop.f32.mrf.mxu0
    %1100 = vmatprep.mubr.bf16.mxu0 0
    %1101 = vmatmul.mubr.bf16.gmra.mxu0 %v948
    %v1102 = vpop.f32.mrf.mxu0
    %v1103 = vadd.f32 0.0, %v1102
    %v1104 = vpop.f32.mrf.mxu0
    %v1105 = vpop.f32.mrf.mxu0
    %v1106 = vadd.f32 0.0, %v1105
    %v1107 = vpop.f32.mrf.mxu0
    %1108 = vmatprep.mubr.bf16.mxu0 0
    %1109 = vmatmul.mubr.bf16.gmra.mxu0 %v951
    %v1110 = vpop.f32.mrf.mxu0
    %v1111 = vadd.f32 0.0, %v1110
    %v1112 = vpop.f32.mrf.mxu0
    %v1113 = vpop.f32.mrf.mxu0
    %v1114 = vadd.f32 0.0, %v1113
    %v1115 = vpop.f32.mrf.mxu0
    %1116 = vmatprep.mubr.bf16.mxu0 0
    %1117 = vmatmul.mubr.bf16.gmra.mxu0 %v954
    %v1118 = vpop.f32.mrf.mxu0
    %v1119 = vadd.f32 0.0, %v1118
    %v1120 = vpop.f32.mrf.mxu0
    %v1121 = vpop.f32.mrf.mxu0
    %v1122 = vadd.f32 0.0, %v1121
    %v1123 = vpop.f32.mrf.mxu0
    %1124 = vmatprep.mubr.bf16.mxu0 0
    %1125 = vmatmul.mubr.bf16.gmra.mxu0 %v957
    %v1126 = vpop.f32.mrf.mxu0
    %v1127 = vadd.f32 0.0, %v1126
    %v1128 = vpop.f32.mrf.mxu0
    %v1129 = vpop.f32.mrf.mxu0
    %v1130 = vadd.f32 0.0, %v1129
    %v1131 = vpop.f32.mrf.mxu0
    %1132 = vmatprep.mubr.bf16.mxu0 0
    %1133 = vmatmul.mubr.bf16.gmra.mxu0 %v960
    %v1134 = vpop.f32.mrf.mxu0
    %v1135 = vadd.f32 0.0, %v1134
    %v1136 = vpop.f32.mrf.mxu0
    %v1137 = vpop.f32.mrf.mxu0
    %v1138 = vadd.f32 0.0, %v1137
    %v1139 = vpop.f32.mrf.mxu0
    %1140 = vmatprep.mubr.bf16.mxu0 0
    %1141 = vmatmul.mubr.bf16.gmra.mxu0 %v963
    %v1142 = vpop.f32.mrf.mxu0
    %v1143 = vadd.f32 0.0, %v1142
    %v1144 = vpop.f32.mrf.mxu0
    %v1145 = vpop.f32.mrf.mxu0
    %v1146 = vadd.f32 0.0, %v1145
    %v1147 = vpop.f32.mrf.mxu0
    %1148 = vmatprep.mubr.bf16.mxu0 0
    %1149 = vmatmul.mubr.bf16.gmra.mxu0 %v966
    %v1150 = vpop.f32.mrf.mxu0
    %v1151 = vadd.f32 0.0, %v1150
    %v1152 = vpop.f32.mrf.mxu0
    %v1153 = vpop.f32.mrf.mxu0
    %v1154 = vadd.f32 0.0, %v1153
    %v1155 = vpop.f32.mrf.mxu0
    %1156 = vmatprep.mubr.bf16.mxu0 0
    %1157 = vmatmul.mubr.bf16.gmra.mxu0 %v969
    %v1158 = vpop.f32.mrf.mxu0
    %v1159 = vadd.f32 0.0, %v1158
    %v1160 = vpop.f32.mrf.mxu0
    %v1161 = vpop.f32.mrf.mxu0
    %v1162 = vadd.f32 0.0, %v1161
    %v1163 = vpop.f32.mrf.mxu0
    %1164 = vmatprep.mubr.bf16.mxu0 0
    %1165 = vmatmul.mubr.bf16.gmra.mxu0 %v972
    %v1166 = vpop.f32.mrf.mxu0
    %v1167 = vadd.f32 0.0, %v1166
    %v1168 = vpop.f32.mrf.mxu0
    %v1169 = vpop.f32.mrf.mxu0
    %v1170 = vadd.f32 0.0, %v1169
    %v1171 = vpop.f32.mrf.mxu0
    %1172 = vmatprep.mubr.bf16.mxu0 0
    %1173 = vmatmul.mubr.bf16.gmra.mxu0 %v975
    %v1174 = vpop.f32.mrf.mxu0
    %v1175 = vadd.f32 0.0, %v1174
    %v1176 = vpop.f32.mrf.mxu0
    %v1177 = vpop.f32.mrf.mxu0
    %v1178 = vadd.f32 0.0, %v1177
    %v1179 = vpop.f32.mrf.mxu0
    %1180 = vmatprep.mubr.bf16.mxu0 0
    %1181 = vmatmul.mubr.bf16.gmra.mxu0 %v978
    %v1182 = vpop.f32.mrf.mxu0
    %v1183 = vadd.f32 0.0, %v1182
    %v1184 = vpop.f32.mrf.mxu0
    %v1185 = vpop.f32.mrf.mxu0
    %v1186 = vadd.f32 0.0, %v1185
    %v1187 = vpop.f32.mrf.mxu0
    %1188 = vmatprep.mubr.bf16.mxu0 0
    %1189 = vmatmul.mubr.bf16.gmra.mxu0 %v981
    %v1190 = vpop.f32.mrf.mxu0
    %v1191 = vadd.f32 0.0, %v1190
    %v1192 = vpop.f32.mrf.mxu0
    %v1193 = vpop.f32.mrf.mxu0
    %v1194 = vadd.f32 0.0, %v1193
    %v1195 = vpop.f32.mrf.mxu0
    %1196 = vmatprep.mubr.bf16.mxu0 0
    %1197 = vmatmul.mubr.bf16.gmra.mxu0 %v984
    %v1198 = vpop.f32.mrf.mxu0
    %v1199 = vadd.f32 0.0, %v1198
    %v1200 = vpop.f32.mrf.mxu0
    %v1201 = vpop.f32.mrf.mxu0
    %v1202 = vadd.f32 0.0, %v1201
    %v1203 = vpop.f32.mrf.mxu0
    %1204 = vmatprep.mubr.bf16.mxu0 0
    %1205 = vmatmul.mubr.bf16.gmra.mxu0 %v987
    %v1206 = vpop.f32.mrf.mxu0
    %v1207 = vadd.f32 0.0, %v1206
    %v1208 = vpop.f32.mrf.mxu0
    %v1209 = vpop.f32.mrf.mxu0
    %v1210 = vadd.f32 0.0, %v1209
    %v1211 = vpop.f32.mrf.mxu0
    %1212 = vmatprep.mubr.bf16.mxu0 0
    %1213 = vmatmul.mubr.bf16.gmra.mxu0 %v990
    %v1214 = vpop.f32.mrf.mxu0
    %v1215 = vadd.f32 0.0, %v1214
    %v1216 = vpop.f32.mrf.mxu0
    %v1217 = vpop.f32.mrf.mxu0
    %v1218 = vadd.f32 0.0, %v1217
    %v1219 = vpop.f32.mrf.mxu0
    %1220 = vmatprep.mubr.bf16.mxu0 0
    %1221 = vmatmul.mubr.bf16.gmra.mxu0 %v993
    %v1222 = vpop.f32.mrf.mxu0
    %v1223 = vadd.f32 0.0, %v1222
    %v1224 = vpop.f32.mrf.mxu0
    %v1225 = vpop.f32.mrf.mxu0
    %v1226 = vadd.f32 0.0, %v1225
    %v1227 = vpop.f32.mrf.mxu0
    %1228 = vmatprep.mubr.bf16.mxu0 0
    %1229 = vmatmul.mubr.bf16.gmra.mxu0 %v996
    %v1230 = vpop.f32.mrf.mxu0
    %v1231 = vadd.f32 0.0, %v1230
    %v1232 = vpop.f32.mrf.mxu0
    %v1233 = vpop.f32.mrf.mxu0
    %v1234 = vadd.f32 0.0, %v1233
    %v1235 = vpop.f32.mrf.mxu0
    %1236 = vmatprep.mubr.bf16.mxu0 0
    %1237 = vmatmul.mubr.bf16.gmra.mxu0 %v999
    %v1238 = vpop.f32.mrf.mxu0
    %v1239 = vadd.f32 0.0, %v1238
    %v1240 = vpop.f32.mrf.mxu0
    %v1241 = vpop.f32.mrf.mxu0
    %v1242 = vadd.f32 0.0, %v1241
    %v1243 = vpop.f32.mrf.mxu0
    %1244 = vmatprep.mubr.bf16.mxu0 0
    %1245 = vmatmul.mubr.bf16.gmra.mxu0 %v1002
    %v1246 = vpop.f32.mrf.mxu0
    %v1247 = vadd.f32 0.0, %v1246
    %v1248 = vpop.f32.mrf.mxu0
    %v1249 = vpop.f32.mrf.mxu0
    %v1250 = vadd.f32 0.0, %v1249
    %v1251 = vpop.f32.mrf.mxu0
    %1252 = vmatprep.mubr.bf16.mxu0 0
    %1253 = vmatmul.mubr.bf16.gmra.mxu0 %v1005
    %v1254 = vpop.f32.mrf.mxu0
    %v1255 = vadd.f32 0.0, %v1254
    %v1256 = vpop.f32.mrf.mxu0
    %v1257 = vpop.f32.mrf.mxu0
    %v1258 = vadd.f32 0.0, %v1257
    %v1259 = vpop.f32.mrf.mxu0
    %1260 = vmatprep.mubr.bf16.mxu0 0
    %1261 = vmatmul.mubr.bf16.gmra.mxu0 %v1008
    %v1262 = vpop.f32.mrf.mxu0
    %v1263 = vadd.f32 0.0, %v1262
    %v1264 = vpop.f32.mrf.mxu0
    %v1265 = vpop.f32.mrf.mxu0
    %v1266 = vadd.f32 0.0, %v1265
    %v1267 = vpop.f32.mrf.mxu0
    %1268 = vmatprep.mubr.bf16.mxu0 0
    %1269 = vmatmul.mubr.bf16.gmra.mxu0 %v1011
    %v1270 = vpop.f32.mrf.mxu0
    %v1271 = vadd.f32 0.0, %v1270
    %v1272 = vpop.f32.mrf.mxu0
    %v1273 = vpop.f32.mrf.mxu0
    %v1274 = vadd.f32 0.0, %v1273
    %v1275 = vpop.f32.mrf.mxu0
    %1276 = vmatprep.mubr.bf16.mxu0 0
    %1277 = vmatmul.mubr.bf16.gmra.mxu0 %v1014
    %v1278 = vpop.f32.mrf.mxu0
    %v1279 = vadd.f32 0.0, %v1278
    %v1280 = vpop.f32.mrf.mxu0
    %v1281 = vpop.f32.mrf.mxu0
    %v1282 = vadd.f32 0.0, %v1281
    %v1283 = vpop.f32.mrf.mxu0
    %1284 = vmatprep.mubr.bf16.mxu0 0
    %1285 = vmatmul.mubr.bf16.gmra.mxu0 %v1017
    %v1286 = vpop.f32.mrf.mxu0
    %v1287 = vadd.f32 0.0, %v1286
    %v1288 = vpop.f32.mrf.mxu0
    %v1289 = vpop.f32.mrf.mxu0
    %v1290 = vadd.f32 0.0, %v1289
    %v1291 = vpop.f32.mrf.mxu0
    %1292 = vmatprep.mubr.bf16.mxu0 0
    %1293 = vmatmul.mubr.bf16.gmra.mxu0 %v1020
    %v1294 = vpop.f32.mrf.mxu0
    %v1295 = vadd.f32 0.0, %v1294
    %v1296 = vpop.f32.mrf.mxu0
    %v1297 = vpop.f32.mrf.mxu0
    %v1298 = vadd.f32 0.0, %v1297
    %v1299 = vpop.f32.mrf.mxu0
    %1300 = vmatprep.mubr.bf16.mxu0 0
    %1301 = vmatmul.mubr.bf16.gmra.mxu0 %v1023
    %v1302 = vpop.f32.mrf.mxu0
    %v1303 = vadd.f32 0.0, %v1302
    %v1304 = vpop.f32.mrf.mxu0
    %v1305 = vpop.f32.mrf.mxu0
    %v1306 = vadd.f32 0.0, %v1305
    %v1307 = vpop.f32.mrf.mxu0
    %1308 = vmatprep.mubr.bf16.mxu0 0
    %1309 = vmatmul.mubr.bf16.gmra.mxu0 %v1026
    %v1310 = vpop.f32.mrf.mxu0
    %v1311 = vadd.f32 0.0, %v1310
    %v1312 = vpop.f32.mrf.mxu0
    %v1313 = vpop.f32.mrf.mxu0
    %v1314 = vadd.f32 0.0, %v1313
    %v1315 = vpop.f32.mrf.mxu0
    %1316 = vdwg.mxu0
    %v1317 = vpack.c.bf16 %v1066, %v1063
    %v1318 = vpack.c.bf16 %v1074, %v1071
    %v1319 = vpack.c.bf16 %v1082, %v1079
    %v1320 = vpack.c.bf16 %v1090, %v1087
    %v1321 = vpack.c.bf16 %v1098, %v1095
    %v1322 = vpack.c.bf16 %v1106, %v1103
    %v1323 = vpack.c.bf16 %v1114, %v1111
    %v1324 = vpack.c.bf16 %v1122, %v1119
    %v1325 = vpack.c.bf16 %v1130, %v1127
    %v1326 = vpack.c.bf16 %v1138, %v1135
    %v1327 = vpack.c.bf16 %v1146, %v1143
    %v1328 = vpack.c.bf16 %v1154, %v1151
    %v1329 = vpack.c.bf16 %v1162, %v1159
    %v1330 = vpack.c.bf16 %v1170, %v1167
    %v1331 = vpack.c.bf16 %v1178, %v1175
    %v1332 = vpack.c.bf16 %v1186, %v1183
    %v1333 = vpack.c.bf16 %v1194, %v1191
    %v1334 = vpack.c.bf16 %v1202, %v1199
    %v1335 = vpack.c.bf16 %v1210, %v1207
    %v1336 = vpack.c.bf16 %v1218, %v1215
    %v1337 = vpack.c.bf16 %v1226, %v1223
    %v1338 = vpack.c.bf16 %v1234, %v1231
    %v1339 = vpack.c.bf16 %v1242, %v1239
    %v1340 = vpack.c.bf16 %v1250, %v1247
    %v1341 = vpack.c.bf16 %v1258, %v1255
    %v1342 = vpack.c.bf16 %v1266, %v1263
    %v1343 = vpack.c.bf16 %v1274, %v1271
    %v1344 = vpack.c.bf16 %v1282, %v1279
    %v1345 = vpack.c.bf16 %v1290, %v1287
    %v1346 = vpack.c.bf16 %v1298, %v1295
    %v1347 = vpack.c.bf16 %v1306, %v1303
    %v1348 = vpack.c.bf16 %v1314, %v1311
    %v1381 = vunpack.c.l.b16 %v1317
    %v1382 = vunpack.c.h.b16 %v1317
    %v1383 = vunpack.c.l.b16 %v1318
    %v1384 = vunpack.c.h.b16 %v1318
    %v1385 = vunpack.c.l.b16 %v1319
    %v1386 = vunpack.c.h.b16 %v1319
    %v1387 = vunpack.c.l.b16 %v1320
    %v1388 = vunpack.c.h.b16 %v1320
    %v1389 = vunpack.c.l.b16 %v1321
    %v1390 = vunpack.c.h.b16 %v1321
    %v1391 = vunpack.c.l.b16 %v1322
    %v1392 = vunpack.c.h.b16 %v1322
    %v1393 = vunpack.c.l.b16 %v1323
    %v1394 = vunpack.c.h.b16 %v1323
    %v1395 = vunpack.c.l.b16 %v1324
    %v1396 = vunpack.c.h.b16 %v1324
    %v1397 = vunpack.c.l.b16 %v1325
    %v1398 = vunpack.c.h.b16 %v1325
    %v1399 = vunpack.c.l.b16 %v1326
    %v1400 = vunpack.c.h.b16 %v1326
    %v1401 = vunpack.c.l.b16 %v1327
    %v1402 = vunpack.c.h.b16 %v1327
    %v1403 = vunpack.c.l.b16 %v1328
    %v1404 = vunpack.c.h.b16 %v1328
    %v1405 = vunpack.c.l.b16 %v1329
    %v1406 = vunpack.c.h.b16 %v1329
    %v1407 = vunpack.c.l.b16 %v1330
    %v1408 = vunpack.c.h.b16 %v1330
    %v1409 = vunpack.c.l.b16 %v1331
    %v1410 = vunpack.c.h.b16 %v1331
    %v1411 = vunpack.c.l.b16 %v1332
    %v1412 = vunpack.c.h.b16 %v1332
    %v1413 = vunpack.c.l.b16 %v1333
    %v1414 = vunpack.c.h.b16 %v1333
    %v1415 = vunpack.c.l.b16 %v1334
    %v1416 = vunpack.c.h.b16 %v1334
    %v1417 = vunpack.c.l.b16 %v1335
    %v1418 = vunpack.c.h.b16 %v1335
    %v1419 = vunpack.c.l.b16 %v1336
    %v1420 = vunpack.c.h.b16 %v1336
    %v1421 = vunpack.c.l.b16 %v1337
    %v1422 = vunpack.c.h.b16 %v1337
    %v1423 = vunpack.c.l.b16 %v1338
    %v1424 = vunpack.c.h.b16 %v1338
    %v1425 = vunpack.c.l.b16 %v1339
    %v1426 = vunpack.c.h.b16 %v1339
    %v1427 = vunpack.c.l.b16 %v1340
    %v1428 = vunpack.c.h.b16 %v1340
    %v1429 = vunpack.c.l.b16 %v1341
    %v1430 = vunpack.c.h.b16 %v1341
    %v1431 = vunpack.c.l.b16 %v1342
    %v1432 = vunpack.c.h.b16 %v1342
    %v1433 = vunpack.c.l.b16 %v1343
    %v1434 = vunpack.c.h.b16 %v1343
    %v1435 = vunpack.c.l.b16 %v1344
    %v1436 = vunpack.c.h.b16 %v1344
    %v1437 = vunpack.c.l.b16 %v1345
    %v1438 = vunpack.c.h.b16 %v1345
    %v1439 = vunpack.c.l.b16 %v1346
    %v1440 = vunpack.c.h.b16 %v1346
    %v1441 = vunpack.c.l.b16 %v1347
    %v1442 = vunpack.c.h.b16 %v1347
    %v1443 = vunpack.c.l.b16 %v1348
    %v1444 = vunpack.c.h.b16 %v1348
    %v1445 = vpack.c.b16 %v1381, %v1381
    %v1446 = vpack.c.b16 %v1382, %v1382
    %v1447 = vpack.c.b16 %v1383, %v1383
    %v1448 = vpack.c.b16 %v1384, %v1384
    %v1449 = vpack.c.b16 %v1385, %v1385
    %v1450 = vpack.c.b16 %v1386, %v1386
    %v1451 = vpack.c.b16 %v1387, %v1387
    %v1452 = vpack.c.b16 %v1388, %v1388
    %v1453 = vpack.c.b16 %v1389, %v1389
    %v1454 = vpack.c.b16 %v1390, %v1390
    %v1455 = vpack.c.b16 %v1391, %v1391
    %v1456 = vpack.c.b16 %v1392, %v1392
    %v1457 = vpack.c.b16 %v1393, %v1393
    %v1458 = vpack.c.b16 %v1394, %v1394
    %v1459 = vpack.c.b16 %v1395, %v1395
    %v1460 = vpack.c.b16 %v1396, %v1396
    %v1461 = vpack.c.b16 %v1397, %v1397
    %v1462 = vpack.c.b16 %v1398, %v1398
    %v1463 = vpack.c.b16 %v1399, %v1399
    %v1464 = vpack.c.b16 %v1400, %v1400
    %v1465 = vpack.c.b16 %v1401, %v1401
    %v1466 = vpack.c.b16 %v1402, %v1402
    %v1467 = vpack.c.b16 %v1403, %v1403
    %v1468 = vpack.c.b16 %v1404, %v1404
    %v1469 = vpack.c.b16 %v1405, %v1405
    %v1470 = vpack.c.b16 %v1406, %v1406
    %v1471 = vpack.c.b16 %v1407, %v1407
    %v1472 = vpack.c.b16 %v1408, %v1408
    %v1473 = vpack.c.b16 %v1409, %v1409
    %v1474 = vpack.c.b16 %v1410, %v1410
    %v1475 = vpack.c.b16 %v1411, %v1411
    %v1476 = vpack.c.b16 %v1412, %v1412
    %v1477 = vpack.c.b16 %v1413, %v1413
    %v1478 = vpack.c.b16 %v1414, %v1414
    %v1479 = vpack.c.b16 %v1415, %v1415
    %v1480 = vpack.c.b16 %v1416, %v1416
    %v1481 = vpack.c.b16 %v1417, %v1417
    %v1482 = vpack.c.b16 %v1418, %v1418
    %v1483 = vpack.c.b16 %v1419, %v1419
    %v1484 = vpack.c.b16 %v1420, %v1420
    %v1485 = vpack.c.b16 %v1421, %v1421
    %v1486 = vpack.c.b16 %v1422, %v1422
    %v1487 = vpack.c.b16 %v1423, %v1423
    %v1488 = vpack.c.b16 %v1424, %v1424
    %v1489 = vpack.c.b16 %v1425, %v1425
    %v1490 = vpack.c.b16 %v1426, %v1426
    %v1491 = vpack.c.b16 %v1427, %v1427
    %v1492 = vpack.c.b16 %v1428, %v1428
    %v1493 = vpack.c.b16 %v1429, %v1429
    %v1494 = vpack.c.b16 %v1430, %v1430
    %v1495 = vpack.c.b16 %v1431, %v1431
    %v1496 = vpack.c.b16 %v1432, %v1432
    %v1497 = vpack.c.b16 %v1433, %v1433
    %v1498 = vpack.c.b16 %v1434, %v1434
    %v1499 = vpack.c.b16 %v1435, %v1435
    %v1500 = vpack.c.b16 %v1436, %v1436
    %v1501 = vpack.c.b16 %v1437, %v1437
    %v1502 = vpack.c.b16 %v1438, %v1438
    %v1503 = vpack.c.b16 %v1439, %v1439
    %v1504 = vpack.c.b16 %v1440, %v1440
    %v1505 = vpack.c.b16 %v1441, %v1441
    %v1506 = vpack.c.b16 %v1442, %v1442
    %v1507 = vpack.c.b16 %v1443, %v1443
    %v1508 = vpack.c.b16 %v1444, %v1444
    %1573 = vst [vmem:[#allocation2] sm:$0xf] %v1445
    %1574 = vst [vmem:[#allocation2 + $0x4] sm:$0xf] %v1446
    %1575 = vst [vmem:[#allocation2 + $0x8] sm:$0xf] %v1447
    %1576 = vst [vmem:[#allocation2 + $0xc] sm:$0xf] %v1448
    %1577 = vst [vmem:[#allocation2 + $0x10] sm:$0xf] %v1449
    %1578 = vst [vmem:[#allocation2 + $0x14] sm:$0xf] %v1450
    %1579 = vst [vmem:[#allocation2 + $0x18] sm:$0xf] %v1451
    %1580 = vst [vmem:[#allocation2 + $0x1c] sm:$0xf] %v1452
    %1581 = vst [vmem:[#allocation2 + $0x20] sm:$0xf] %v1453
    %1582 = vst [vmem:[#allocation2 + $0x24] sm:$0xf] %v1454
    %1583 = vst [vmem:[#allocation2 + $0x28] sm:$0xf] %v1455
    %1584 = vst [vmem:[#allocation2 + $0x2c] sm:$0xf] %v1456
    %1585 = vst [vmem:[#allocation2 + $0x30] sm:$0xf] %v1457
    %1586 = vst [vmem:[#allocation2 + $0x34] sm:$0xf] %v1458
    %1587 = vst [vmem:[#allocation2 + $0x38] sm:$0xf] %v1459
    %1588 = vst [vmem:[#allocation2 + $0x3c] sm:$0xf] %v1460
    %1589 = vst [vmem:[#allocation2 + $0x40] sm:$0xf] %v1461
    %1590 = vst [vmem:[#allocation2 + $0x44] sm:$0xf] %v1462
    %1591 = vst [vmem:[#allocation2 + $0x48] sm:$0xf] %v1463
    %1592 = vst [vmem:[#allocation2 + $0x4c] sm:$0xf] %v1464
    %1593 = vst [vmem:[#allocation2 + $0x50] sm:$0xf] %v1465
    %1594 = vst [vmem:[#allocation2 + $0x54] sm:$0xf] %v1466
    %1595 = vst [vmem:[#allocation2 + $0x58] sm:$0xf] %v1467
    %1596 = vst [vmem:[#allocation2 + $0x5c] sm:$0xf] %v1468
    %1597 = vst [vmem:[#allocation2 + $0x60] sm:$0xf] %v1469
    %1598 = vst [vmem:[#allocation2 + $0x64] sm:$0xf] %v1470
    %1599 = vst [vmem:[#allocation2 + $0x68] sm:$0xf] %v1471
    %1600 = vst [vmem:[#allocation2 + $0x6c] sm:$0xf] %v1472
    %1601 = vst [vmem:[#allocation2 + $0x70] sm:$0xf] %v1473
    %1602 = vst [vmem:[#allocation2 + $0x74] sm:$0xf] %v1474
    %1603 = vst [vmem:[#allocation2 + $0x78] sm:$0xf] %v1475
    %1604 = vst [vmem:[#allocation2 + $0x7c] sm:$0xf] %v1476
    %1605 = vst [vmem:[#allocation2 + $0x80] sm:$0xf] %v1477
    %1606 = vst [vmem:[#allocation2 + $0x84] sm:$0xf] %v1478
    %1607 = vst [vmem:[#allocation2 + $0x88] sm:$0xf] %v1479
    %1608 = vst [vmem:[#allocation2 + $0x8c] sm:$0xf] %v1480
    %1609 = vst [vmem:[#allocation2 + $0x90] sm:$0xf] %v1481
    %1610 = vst [vmem:[#allocation2 + $0x94] sm:$0xf] %v1482
    %1611 = vst [vmem:[#allocation2 + $0x98] sm:$0xf] %v1483
    %1612 = vst [vmem:[#allocation2 + $0x9c] sm:$0xf] %v1484
    %1613 = vst [vmem:[#allocation2 + $0xa0] sm:$0xf] %v1485
    %1614 = vst [vmem:[#allocation2 + $0xa4] sm:$0xf] %v1486
    %1615 = vst [vmem:[#allocation2 + $0xa8] sm:$0xf] %v1487
    %1616 = vst [vmem:[#allocation2 + $0xac] sm:$0xf] %v1488
    %1617 = vst [vmem:[#allocation2 + $0xb0] sm:$0xf] %v1489
    %1618 = vst [vmem:[#allocation2 + $0xb4] sm:$0xf] %v1490
    %1619 = vst [vmem:[#allocation2 + $0xb8] sm:$0xf] %v1491
    %1620 = vst [vmem:[#allocation2 + $0xbc] sm:$0xf] %v1492
    %1621 = vst [vmem:[#allocation2 + $0xc0] sm:$0xf] %v1493
    %1622 = vst [vmem:[#allocation2 + $0xc4] sm:$0xf] %v1494
    %1623 = vst [vmem:[#allocation2 + $0xc8] sm:$0xf] %v1495
    %1624 = vst [vmem:[#allocation2 + $0xcc] sm:$0xf] %v1496
    %1625 = vst [vmem:[#allocation2 + $0xd0] sm:$0xf] %v1497
    %1626 = vst [vmem:[#allocation2 + $0xd4] sm:$0xf] %v1498
    %1627 = vst [vmem:[#allocation2 + $0xd8] sm:$0xf] %v1499
    %1628 = vst [vmem:[#allocation2 + $0xdc] sm:$0xf] %v1500
    %1629 = vst [vmem:[#allocation2 + $0xe0] sm:$0xf] %v1501
    %1630 = vst [vmem:[#allocation2 + $0xe4] sm:$0xf] %v1502
    %1631 = vst [vmem:[#allocation2 + $0xe8] sm:$0xf] %v1503
    %1632 = vst [vmem:[#allocation2 + $0xec] sm:$0xf] %v1504
    %1633 = vst [vmem:[#allocation2 + $0xf0] sm:$0xf] %v1505
    %1634 = vst [vmem:[#allocation2 + $0xf4] sm:$0xf] %v1506
    %1635 = vst [vmem:[#allocation2 + $0xf8] sm:$0xf] %v1507
    %1636 = vst [vmem:[#allocation2 + $0xfc] sm:$0xf] %v1508
    %v1637 = vld [vmem:[#allocation4] sm:$0x1]
    %v1638 = vadd.f32 %v1063, %v1066
    %v1639 = vadd.f32 %v1638, %v1071
    %v1640 = vadd.f32 %v1639, %v1074
    %v1641 = vadd.f32 %v1640, %v1079
    %v1642 = vadd.f32 %v1641, %v1082
    %v1643 = vadd.f32 %v1642, %v1087
    %v1644 = vadd.f32 %v1643, %v1090
    %v1645 = vadd.f32 %v1644, %v1095
    %v1646 = vadd.f32 %v1645, %v1098
    %v1647 = vadd.f32 %v1646, %v1103
    %v1648 = vadd.f32 %v1647, %v1106
    %v1649 = vadd.f32 %v1648, %v1111
    %v1650 = vadd.f32 %v1649, %v1114
    %v1651 = vadd.f32 %v1650, %v1119
    %v1652 = vadd.f32 %v1651, %v1122
    %v1653 = vadd.f32 %v1652, %v1127
    %v1654 = vadd.f32 %v1653, %v1130
    %v1655 = vadd.f32 %v1654, %v1135
    %v1656 = vadd.f32 %v1655, %v1138
    %v1657 = vadd.f32 %v1656, %v1143
    %v1658 = vadd.f32 %v1657, %v1146
    %v1659 = vadd.f32 %v1658, %v1151
    %v1660 = vadd.f32 %v1659, %v1154
    %v1661 = vadd.f32 %v1660, %v1159
    %v1662 = vadd.f32 %v1661, %v1162
    %v1663 = vadd.f32 %v1662, %v1167
    %v1664 = vadd.f32 %v1663, %v1170
    %v1665 = vadd.f32 %v1664, %v1175
    %v1666 = vadd.f32 %v1665, %v1178
    %v1667 = vadd.f32 %v1666, %v1183
    %v1668 = vadd.f32 %v1667, %v1186
    %v1669 = vadd.f32 %v1668, %v1191
    %v1670 = vadd.f32 %v1669, %v1194
    %v1671 = vadd.f32 %v1670, %v1199
    %v1672 = vadd.f32 %v1671, %v1202
    %v1673 = vadd.f32 %v1672, %v1207
    %v1674 = vadd.f32 %v1673, %v1210
    %v1675 = vadd.f32 %v1674, %v1215
    %v1676 = vadd.f32 %v1675, %v1218
    %v1677 = vadd.f32 %v1676, %v1223
    %v1678 = vadd.f32 %v1677, %v1226
    %v1679 = vadd.f32 %v1678, %v1231
    %v1680 = vadd.f32 %v1679, %v1234
    %v1681 = vadd.f32 %v1680, %v1239
    %v1682 = vadd.f32 %v1681, %v1242
    %v1683 = vadd.f32 %v1682, %v1247
    %v1684 = vadd.f32 %v1683, %v1250
    %v1685 = vadd.f32 %v1684, %v1255
    %v1686 = vadd.f32 %v1685, %v1258
    %v1687 = vadd.f32 %v1686, %v1263
    %v1688 = vadd.f32 %v1687, %v1266
    %v1689 = vadd.f32 %v1688, %v1271
    %v1690 = vadd.f32 %v1689, %v1274
    %v1691 = vadd.f32 %v1690, %v1279
    %v1692 = vadd.f32 %v1691, %v1282
    %v1693 = vadd.f32 %v1692, %v1287
    %v1694 = vadd.f32 %v1693, %v1290
    %v1695 = vadd.f32 %v1694, %v1295
    %v1696 = vadd.f32 %v1695, %v1298
    %v1697 = vadd.f32 %v1696, %v1303
    %v1698 = vadd.f32 %v1697, %v1306
    %v1699 = vadd.f32 %v1698, %v1311
    %v1700 = vadd.f32 %v1699, %v1314
    %v1701 = vrot.slane %v1700, 4
    %v1702 = vadd.f32 %v1700, %v1701
    %v1703 = vrot.slane %v1702, 2
    %v1704 = vadd.f32 %v1702, %v1703
    %v1705 = vrot.slane %v1704, 1
    %v1706 = vadd.f32 %v1704, %v1705
    %v1707 = vadd.f32 %v1637, %v1706
    %1708 = vst [vmem:[#allocation4] sm:$0x1] %v1707
    %v1709 = vld [vmem:[#allocation6] sm:$0x1]
    %v1710 = vmul.f32 %v1063, %v1063
    %v1711 = vmul.f32 %v1066, %v1066
    %v1712 = vmul.f32 %v1071, %v1071
    %v1713 = vmul.f32 %v1074, %v1074
    %v1714 = vmul.f32 %v1079, %v1079
    %v1715 = vmul.f32 %v1082, %v1082
    %v1716 = vmul.f32 %v1087, %v1087
    %v1717 = vmul.f32 %v1090, %v1090
    %v1718 = vmul.f32 %v1095, %v1095
    %v1719 = vmul.f32 %v1098, %v1098
    %v1720 = vmul.f32 %v1103, %v1103
    %v1721 = vmul.f32 %v1106, %v1106
    %v1722 = vmul.f32 %v1111, %v1111
    %v1723 = vmul.f32 %v1114, %v1114
    %v1724 = vmul.f32 %v1119, %v1119
    %v1725 = vmul.f32 %v1122, %v1122
    %v1726 = vmul.f32 %v1127, %v1127
    %v1727 = vmul.f32 %v1130, %v1130
    %v1728 = vmul.f32 %v1135, %v1135
    %v1729 = vmul.f32 %v1138, %v1138
    %v1730 = vmul.f32 %v1143, %v1143
    %v1731 = vmul.f32 %v1146, %v1146
    %v1732 = vmul.f32 %v1151, %v1151
    %v1733 = vmul.f32 %v1154, %v1154
    %v1734 = vmul.f32 %v1159, %v1159
    %v1735 = vmul.f32 %v1162, %v1162
    %v1736 = vmul.f32 %v1167, %v1167
    %v1737 = vmul.f32 %v1170, %v1170
    %v1738 = vmul.f32 %v1175, %v1175
    %v1739 = vmul.f32 %v1178, %v1178
    %v1740 = vmul.f32 %v1183, %v1183
    %v1741 = vmul.f32 %v1186, %v1186
    %v1742 = vmul.f32 %v1191, %v1191
    %v1743 = vmul.f32 %v1194, %v1194
    %v1744 = vmul.f32 %v1199, %v1199
    %v1745 = vmul.f32 %v1202, %v1202
    %v1746 = vmul.f32 %v1207, %v1207
    %v1747 = vmul.f32 %v1210, %v1210
    %v1748 = vmul.f32 %v1215, %v1215
    %v1749 = vmul.f32 %v1218, %v1218
    %v1750 = vmul.f32 %v1223, %v1223
    %v1751 = vmul.f32 %v1226, %v1226
    %v1752 = vmul.f32 %v1231, %v1231
    %v1753 = vmul.f32 %v1234, %v1234
    %v1754 = vmul.f32 %v1239, %v1239
    %v1755 = vmul.f32 %v1242, %v1242
    %v1756 = vmul.f32 %v1247, %v1247
    %v1757 = vmul.f32 %v1250, %v1250
    %v1758 = vmul.f32 %v1255, %v1255
    %v1759 = vmul.f32 %v1258, %v1258
    %v1760 = vmul.f32 %v1263, %v1263
    %v1761 = vmul.f32 %v1266, %v1266
    %v1762 = vmul.f32 %v1271, %v1271
    %v1763 = vmul.f32 %v1274, %v1274
    %v1764 = vmul.f32 %v1279, %v1279
    %v1765 = vmul.f32 %v1282, %v1282
    %v1766 = vmul.f32 %v1287, %v1287
    %v1767 = vmul.f32 %v1290, %v1290
    %v1768 = vmul.f32 %v1295, %v1295
    %v1769 = vmul.f32 %v1298, %v1298
    %v1770 = vmul.f32 %v1303, %v1303
    %v1771 = vmul.f32 %v1306, %v1306
    %v1772 = vmul.f32 %v1311, %v1311
    %v1773 = vmul.f32 %v1314, %v1314
    %v1774 = vadd.f32 %v1710, %v1711
    %v1775 = vadd.f32 %v1774, %v1712
    %v1776 = vadd.f32 %v1775, %v1713
    %v1777 = vadd.f32 %v1776, %v1714
    %v1778 = vadd.f32 %v1777, %v1715
    %v1779 = vadd.f32 %v1778, %v1716
    %v1780 = vadd.f32 %v1779, %v1717
    %v1781 = vadd.f32 %v1780, %v1718
    %v1782 = vadd.f32 %v1781, %v1719
    %v1783 = vadd.f32 %v1782, %v1720
    %v1784 = vadd.f32 %v1783, %v1721
    %v1785 = vadd.f32 %v1784, %v1722
    %v1786 = vadd.f32 %v1785, %v1723
    %v1787 = vadd.f32 %v1786, %v1724
    %v1788 = vadd.f32 %v1787, %v1725
    %v1789 = vadd.f32 %v1788, %v1726
    %v1790 = vadd.f32 %v1789, %v1727
    %v1791 = vadd.f32 %v1790, %v1728
    %v1792 = vadd.f32 %v1791, %v1729
    %v1793 = vadd.f32 %v1792, %v1730
    %v1794 = vadd.f32 %v1793, %v1731
    %v1795 = vadd.f32 %v1794, %v1732
    %v1796 = vadd.f32 %v1795, %v1733
    %v1797 = vadd.f32 %v1796, %v1734
    %v1798 = vadd.f32 %v1797, %v1735
    %v1799 = vadd.f32 %v1798, %v1736
    %v1800 = vadd.f32 %v1799, %v1737
    %v1801 = vadd.f32 %v1800, %v1738
    %v1802 = vadd.f32 %v1801, %v1739
    %v1803 = vadd.f32 %v1802, %v1740
    %v1804 = vadd.f32 %v1803, %v1741
    %v1805 = vadd.f32 %v1804, %v1742
    %v1806 = vadd.f32 %v1805, %v1743
    %v1807 = vadd.f32 %v1806, %v1744
    %v1808 = vadd.f32 %v1807, %v1745
    %v1809 = vadd.f32 %v1808, %v1746
    %v1810 = vadd.f32 %v1809, %v1747
    %v1811 = vadd.f32 %v1810, %v1748
    %v1812 = vadd.f32 %v1811, %v1749
    %v1813 = vadd.f32 %v1812, %v1750
    %v1814 = vadd.f32 %v1813, %v1751
    %v1815 = vadd.f32 %v1814, %v1752
    %v1816 = vadd.f32 %v1815, %v1753
    %v1817 = vadd.f32 %v1816, %v1754
    %v1818 = vadd.f32 %v1817, %v1755
    %v1819 = vadd.f32 %v1818, %v1756
    %v1820 = vadd.f32 %v1819, %v1757
    %v1821 = vadd.f32 %v1820, %v1758
    %v1822 = vadd.f32 %v1821, %v1759
    %v1823 = vadd.f32 %v1822, %v1760
    %v1824 = vadd.f32 %v1823, %v1761
    %v1825 = vadd.f32 %v1824, %v1762
    %v1826 = vadd.f32 %v1825, %v1763
    %v1827 = vadd.f32 %v1826, %v1764
    %v1828 = vadd.f32 %v1827, %v1765
    %v1829 = vadd.f32 %v1828, %v1766
    %v1830 = vadd.f32 %v1829, %v1767
    %v1831 = vadd.f32 %v1830, %v1768
    %v1832 = vadd.f32 %v1831, %v1769
    %v1833 = vadd.f32 %v1832, %v1770
    %v1834 = vadd.f32 %v1833, %v1771
    %v1835 = vadd.f32 %v1834, %v1772
    %v1836 = vadd.f32 %v1835, %v1773
    %v1837 = vrot.slane %v1836, 4
    %v1838 = vadd.f32 %v1836, %v1837
    %v1839 = vrot.slane %v1838, 2
    %v1840 = vadd.f32 %v1838, %v1839
    %v1841 = vrot.slane %v1840, 1
    %v1842 = vadd.f32 %v1840, %v1841
    %v1843 = vadd.f32 %v1709, %v1842
    %1844 = vst [vmem:[#allocation6] sm:$0x1] %v1843
    // Predicated region
    $region22: #{tpu_custom_call.1} parent=1 // pred_check
      _
    $region23: #{tpu_custom_call.1} parent=1 // pred_check_branch
      %1846 = sbr.rel (0) target = $region25
    $region24: #{tpu_custom_call.1} parent=1 // pred_region
      %s1847 = sadd.s32 0, 0
      %s1848 = smul.u32 64, %s1847
      %s1850 = ssub.s32 4096, 4096
      %1851 = vsyncadd [#allocation3], %s1850
      %s1852 = smul.addr %s1848, 64
      %s1853 = scalar_lea.hbm %s4, %s1852
      %s1854 = sshll.u32 [#allocation2], 4
      %s1855 = int_to_ptr.vmem [resolvable:$true] %s1854
      %1860 = dma.vmem_to_hbm [thread:$0]  %s1855, 4096, %s1853, [#allocation3], 64, 64, 4
    $region25: #{tpu_custom_call.1} parent=1 // pred_fallthru
      _
    // Predicated region
    $region26: #{tpu_custom_call.1} parent=1 // pred_check
      _
    $region27: #{tpu_custom_call.1} parent=1 // pred_check_branch
      %1862 = sbr.rel (0) target = $region29
    $region28: #{tpu_custom_call.1} parent=1 // pred_region
      %s1864 = ssub.s32 16, 16
      %1865 = vsyncadd [#allocation5], %s1864
      %s1867 = sshll.u32 [#allocation4], 4
      %s1868 = int_to_ptr.vmem [resolvable:$true] %s1867
      %1870 = dma.vmem_to_hbm [thread:$0]  %s1868, 16, %s5, [#allocation5]
    $region29: #{tpu_custom_call.1} parent=1 // pred_fallthru
      _
    // Predicated region
    $region30: #{tpu_custom_call.1} parent=1 // pred_check
      _
    $region31: #{tpu_custom_call.1} parent=1 // pred_check_branch
      %1872 = sbr.rel (0) target = $region33
    $region32: #{tpu_custom_call.1} parent=1 // pred_region
      %s1874 = ssub.s32 16, 16
      %1875 = vsyncadd [#allocation5], %s1874
      %s1877 = sshll.u32 [#allocation6], 4
      %s1878 = int_to_ptr.vmem [resolvable:$true] %s1877
      %1880 = dma.vmem_to_hbm [thread:$0]  %s1878, 16, %s6, [#allocation5]
    $region33: #{tpu_custom_call.1} parent=1 // pred_fallthru
      _
    // Predicated region
    $region34: #{tpu_custom_call.1} parent=1 // pred_check
      _
    $region35: #{tpu_custom_call.1} parent=1 // pred_check_branch
      %1882 = sbr.rel (0) target = $region37
    $region36: #{tpu_custom_call.1} parent=1 // pred_region
      %1883 = dma.done [#allocation3], 4096
    $region37: #{tpu_custom_call.1} parent=1 // pred_fallthru
      _
    // Predicated region
    $region38: #{tpu_custom_call.1} parent=1 // pred_check
      _
    $region39: #{tpu_custom_call.1} parent=1 // pred_check_branch
      %1885 = sbr.rel (0) target = $region41
    $region40: #{tpu_custom_call.1} parent=1 // pred_region
      %1886 = dma.done [#allocation5], 16
    $region41: #{tpu_custom_call.1} parent=1 // pred_fallthru
      _
    // Predicated region
    $region42: #{tpu_custom_call.1} parent=1 // pred_check
      _
    $region43: #{tpu_custom_call.1} parent=1 // pred_check_branch
      %1888 = sbr.rel (0) target = $region45
    $region44: #{tpu_custom_call.1} parent=1 // pred_region
      %1889 = dma.done [#allocation5], 16
    $region45: #{tpu_custom_call.1} parent=1 // pred_fallthru
      _
    %1890 = vsyncpa [#allocation3], 1
    %1891 = vsyncpa [#allocation5], 1

</llo_original>
